<compile_context>
chip_gen: v6e
topology: v6e:2x2x1
jax: 0.10.0
libtpu: 0.0.40
codegen_flags: <defaults>
</compile_context>

<pallas_src>
import functools

import jax
import jax.numpy as jnp
import numpy as np
from jax.experimental import pallas as pl
from jax.experimental.pallas import tpu as pltpu

EPS = 1e-5
KH = KW = 4
STRIDE = 2
PAD = 1


# ------------------------------ Pallas kernel ------------------------------ #
def _bn_relu(y, gamma_col, beta_col):
    """Training-mode BatchNorm (biased variance, centered two-pass) + ReLU.

    y: [C, M] f32, gamma_col/beta_col: [C, 1] f32.  All f32 VPU/XLU work.
    """
    mean = jnp.mean(y, axis=1, keepdims=True)              # [C, 1] cross-lane reduce
    d = y - mean
    var = jnp.mean(d * d, axis=1, keepdims=True)           # centered -> no cancellation
    scale = gamma_col * jax.lax.rsqrt(var + EPS)
    return jnp.maximum(d * scale + beta_col, 0.0)


def _encoder_kernel(pT1_ref, wT1_ref, gb1_ref, S2_ref, w2p_ref, gb2_ref, out_ref,
                    *, n_img, m2_per_img):
    """Whole encoder in one grid step, everything VMEM-resident.

    pT1_ref: [K1, M1]        bf16  im2col patches of the input (K1 = 16*Cin)
    wT1_ref: [C1, K1]        bf16  layer-1 conv weight
    gb1_ref: [C1, 2]         f32   (gamma, beta) layer-1 BN
    S2_ref:  [M1, 16*M2]     bf16  0/1 selection matrix: in-VMEM im2col for layer 2
    w2p_ref: [16*C2, C1]     bf16  layer-2 weight, rows ordered (kernel-pos, c2)
    gb2_ref: [C2, 2]         f32   (gamma, beta) layer-2 BN
    out_ref: [N, C2, OH2*OW2] f32  final activation (NCHW-flattened spatial)
    """
    m2 = n_img * m2_per_img
    c2 = gb2_ref.shape[0]

    # ---- layer 1: conv as GEMM (lane axis = M1), f32 MXU accumulation ----
    y1 = jnp.dot(wT1_ref[...], pT1_ref[...],
                 preferred_element_type=jnp.float32)        # [C1, M1]
    a1 = _bn_relu(y1, gb1_ref[:, 0:1], gb1_ref[:, 1:2])     # [C1, M1] f32

    # ---- layer 2: im2col via 0/1 selection matmul (exact pass-through) ----
    # P[c1, ij*M2 + m2] = a1[c1, input_pos(ij, m2)]   (0 for zero-padded positions)
    P = jnp.dot(a1.astype(jnp.bfloat16), S2_ref[...],
                preferred_element_type=jnp.float32)          # [C1, 16*M2]
    Pb = P.astype(jnp.bfloat16)                              # exact (values are bf16)
    w2 = w2p_ref[...]                                        # [16*C2, C1]

    y2 = jnp.zeros((c2, m2), jnp.float32)
    for ij in range(KH * KW):                                # 16 tiny MXU matmuls, unrolled
        y2 = y2 + jnp.dot(w2[ij * c2:(ij + 1) * c2, :],      # [C2, C1]
                          Pb[:, ij * m2:(ij + 1) * m2],      # [C1, M2]
                          preferred_element_type=jnp.float32)

    o2 = _bn_relu(y2, gb2_ref[:, 0:1], gb2_ref[:, 1:2])      # [C2, M2] f32

    # ---- write output per image: out[n, c, s] = o2[c, n*S + s] ----
    for n in range(n_img):
        out_ref[n, :, :] = o2[:, n * m2_per_img:(n + 1) * m2_per_img]


# ------------------------------ host-side setup ------------------------------ #
def _build_select_matrix(n, oh1, ow1, oh2, ow2):
    """S2[m1, ij*M2 + m2] = 1 iff layer-2 patch element (ij, m2) reads a1[:, m1].

    Out-of-range (zero-padding) positions simply have an all-zero column.
    Pure numpy, evaluated at trace time (shapes only)."""
    m1 = n * oh1 * ow1
    m2 = n * oh2 * ow2
    s = np.zeros((m1, KH * KW * m2), np.float32)
    for b in range(n):
        for oy in range(oh2):
            for ox in range(ow2):
                col_m2 = (b * oh2 + oy) * ow2 + ox
                for i in range(KH):
                    for j in range(KW):
                        hh = STRIDE * oy - PAD + i
                        ww = STRIDE * ox - PAD + j
                        if 0 <= hh < oh1 and 0 <= ww < ow1:
                            row = (b * oh1 + hh) * ow1 + ww
                            s[row, (i * KW + j) * m2 + col_m2] = 1.0
    return s


def encoder_forward(x_nchw, params):
    """Fused Conv-BN(train)-ReLU x2.  params: [(w, bias, gamma, beta)] * 2.

    The conv biases are mathematically a no-op under training-mode BatchNorm
    (they cancel in y - mean), so the kernel drops them (dead work removed)."""
    (w1, _b1, g1, be1), (w2, _b2, g2, be2) = params
    n, cin, h, w = x_nchw.shape
    c1 = w1.shape[0]
    c2 = w2.shape[0]
    oh1 = (h + 2 * PAD - KH) // STRIDE + 1
    ow1 = (w + 2 * PAD - KW) // STRIDE + 1
    oh2 = (oh1 + 2 * PAD - KH) // STRIDE + 1
    ow2 = (ow1 + 2 * PAD - KW) // STRIDE + 1
    m1 = n * oh1 * ow1
    m2 = n * oh2 * ow2
    k1 = KH * KW * cin

    # --- layer-1 im2col in [K, M] layout (tiny; XLA fuses these into one op) ---
    xp = jnp.pad(x_nchw, ((0, 0), (0, 0), (PAD, PAD), (PAD, PAD)))
    cols = [xp[:, :, i:i + STRIDE * oh1:STRIDE, j:j + STRIDE * ow1:STRIDE]
            for i in range(KH) for j in range(KW)]           # each [n, cin, oh1, ow1]
    pT1 = (jnp.stack(cols, axis=0)                           # [16, n, cin, oh1, ow1]
           .transpose(0, 2, 1, 3, 4)                         # [16, cin, n, oh1, ow1]
           .reshape(k1, m1)
           .astype(jnp.bfloat16))

    # Weights: [Cout, Cin, KH, KW] -> GEMM layouts matching the patch orderings.
    wT1 = jnp.transpose(w1, (0, 2, 3, 1)).reshape(c1, k1).astype(jnp.bfloat16)
    w2p = jnp.transpose(w2, (2, 3, 0, 1)).reshape(KH * KW * c2, c1).astype(jnp.bfloat16)

    # Constant in-kernel im2col selection matrix for layer 2 (bf16, ~128 KB here).
    S2 = jnp.asarray(_build_select_matrix(n, oh1, ow1, oh2, ow2), jnp.bfloat16)

    # BN params packed per layer: col0 = gamma, col1 = beta (single small block each).
    gb1 = jnp.stack([g1, be1], axis=1).astype(jnp.float32)   # [c1, 2]
    gb2 = jnp.stack([g2, be2], axis=1).astype(jnp.float32)   # [c2, 2]

    kernel = functools.partial(_encoder_kernel, n_img=n, m2_per_img=oh2 * ow2)
    out = pl.pallas_call(
        kernel,
        out_shape=jax.ShapeDtypeStruct((n, c2, oh2 * ow2), jnp.float32),
        grid_spec=pl.GridSpec(
            grid=(1,),                                        # latency-bound: one step
            in_specs=[
                pl.BlockSpec(pT1.shape, lambda i: (0, 0)),
                pl.BlockSpec(wT1.shape, lambda i: (0, 0)),
                pl.BlockSpec(gb1.shape, lambda i: (0, 0)),
                pl.BlockSpec(S2.shape, lambda i: (0, 0)),
                pl.BlockSpec(w2p.shape, lambda i: (0, 0)),
                pl.BlockSpec(gb2.shape, lambda i: (0, 0)),
            ],
            out_specs=pl.BlockSpec((n, c2, oh2 * ow2), lambda i: (0, 0, 0)),
        ),
        compiler_params=pltpu.CompilerParams(
            dimension_semantics=("arbitrary",),
            vmem_limit_bytes=16 * 1024 * 1024,                # actual use < 1 MiB (v7x-safe)
        ),
    )(pT1, wT1, gb1, S2, w2p, gb2)

    return out.reshape(n, c2, oh2, ow2)                      # metadata-only reshape


# ---------------------------- reference (plain JAX) --------------------------- #
def encoder_reference(x_nchw, params):
    """Conv(+bias) -> BN(train, biased var) -> ReLU, twice.  Conv operands are
    rounded to bf16 with f32 accumulation to match the kernel's MXU precision;
    all other math is f32 (same as the kernel's epilogue)."""
    y = x_nchw
    for (w, b, g, be) in params:
        y = jax.lax.conv_general_dilated(
            y.astype(jnp.bfloat16), w.astype(jnp.bfloat16),
            window_strides=(STRIDE, STRIDE), padding=((PAD, PAD), (PAD, PAD)),
            dimension_numbers=("NCHW", "OIHW", "NCHW"),
            preferred_element_type=jnp.float32)
        y = y + b.reshape(1, -1, 1, 1)                        # bias kept on purpose:
        mean = jnp.mean(y, axis=(0, 2, 3), keepdims=True)     # it cancels right here.
        var = jnp.mean((y - mean) ** 2, axis=(0, 2, 3), keepdims=True)
        y = (y - mean) * jax.lax.rsqrt(var + EPS)
        y = y * g.reshape(1, -1, 1, 1) + be.reshape(1, -1, 1, 1)
        y = jnp.maximum(y, 0.0)
    return y


# ------------------------------------ main ------------------------------------ #
if __name__ == "__main__":
    # Encoder(in_size=4, out_size=8, hidden_size=16) on x: [2, 4, 16, 16]
    in_size, hidden_size, out_size = 4, 16, 8
    N, H, W = 2, 16, 16

    key = jax.random.PRNGKey(0)
    k_x, k_w1, k_b1, k_w2, k_b2, k_g1, k_g2 = jax.random.split(key, 7)

    x = jax.random.normal(k_x, (N, in_size, H, W), dtype=jnp.float32)

    fan1 = in_size * KH * KW
    w1 = jax.random.normal(k_w1, (hidden_size, in_size, KH, KW), jnp.float32) / np.sqrt(fan1)
    b1 = jax.random.normal(k_b1, (hidden_size,), jnp.float32) * 0.1
    g1 = 1.0 + 0.1 * jax.random.normal(k_g1, (hidden_size,), jnp.float32)
    be1 = jnp.zeros((hidden_size,), jnp.float32) + 0.05

    fan2 = hidden_size * KH * KW
    w2 = jax.random.normal(k_w2, (out_size, hidden_size, KH, KW), jnp.float32) / np.sqrt(fan2)
    b2 = jax.random.normal(k_b2, (out_size,), jnp.float32) * 0.1
    g2 = 1.0 + 0.1 * jax.random.normal(k_g2, (out_size,), jnp.float32)
    be2 = jnp.zeros((out_size,), jnp.float32) - 0.05

    params = [(w1, b1, g1, be1), (w2, b2, g2, be2)]

    out = jax.block_until_ready(jax.jit(encoder_forward)(x, params))

    ref = encoder_reference(x, params)
    np.testing.assert_allclose(np.asarray(out), np.asarray(ref), atol=1e-2, rtol=1e-2)
    assert out.shape == (N, out_size, H // 4, W // 4)

    print("KERNEL_OK")
</pallas_src>

<mosaic_0001>
module attributes {stable_mosaic.version = 11 : i64} {
  func.func @_encoder_kernel(%arg0: i32, %arg1: memref<64x128xbf16, #tpu.memory_space<vmem>>, %arg2: memref<16x64xbf16, #tpu.memory_space<vmem>>, %arg3: memref<16x2xf32, #tpu.memory_space<vmem>>, %arg4: memref<128x512xbf16, #tpu.memory_space<vmem>>, %arg5: memref<128x16xbf16, #tpu.memory_space<vmem>>, %arg6: memref<8x2xf32, #tpu.memory_space<vmem>>, %arg7: memref<2x8x16xf32, #tpu.memory_space<vmem>>) attributes {dimension_semantics = [#tpu.dimension_semantics<arbitrary>], iteration_bounds = array<i64: 1>, scalar_prefetch = 0 : i64, scratch_operands = 0 : i64, tpu.core_type = #tpu.core_type<tc>, window_params = [{pipeline_mode = #tpu.pipeline_mode<synchronous>, transform_indices = @transform_0, window_bounds = array<i64: 64, 128>}, {pipeline_mode = #tpu.pipeline_mode<synchronous>, transform_indices = @transform_1, window_bounds = array<i64: 16, 64>}, {pipeline_mode = #tpu.pipeline_mode<synchronous>, transform_indices = @transform_2, window_bounds = array<i64: 16, 2>}, {pipeline_mode = #tpu.pipeline_mode<synchronous>, transform_indices = @transform_3, window_bounds = array<i64: 128, 512>}, {pipeline_mode = #tpu.pipeline_mode<synchronous>, transform_indices = @transform_4, window_bounds = array<i64: 128, 16>}, {pipeline_mode = #tpu.pipeline_mode<synchronous>, transform_indices = @transform_5, window_bounds = array<i64: 8, 2>}, {pipeline_mode = #tpu.pipeline_mode<synchronous>, transform_indices = @transform_6, window_bounds = array<i64: 2, 8, 16>}]} {
    %c0 = arith.constant 0 : index
    %c0_0 = arith.constant 0 : index
    %0 = vector.load %arg2[%c0, %c0_0] : memref<16x64xbf16, #tpu.memory_space<vmem>>, vector<16x64xbf16>
    %c0_1 = arith.constant 0 : index
    %c0_2 = arith.constant 0 : index
    %1 = vector.load %arg1[%c0_1, %c0_2] : memref<64x128xbf16, #tpu.memory_space<vmem>>, vector<64x128xbf16>
    %cst = arith.constant dense<0.000000e+00> : vector<16x128xf32>
    %2 = tpu.matmul %0, %1, %cst {dimension_numbers = #tpu.dot_dimension_numbers<[1], [0], [0], [1], [0, 0, 1, 1], [], []>} : vector<16x64xbf16>, vector<64x128xbf16>, vector<16x128xf32> -> vector<16x128xf32>
    %c0_3 = arith.constant 0 : index
    %c0_4 = arith.constant 0 : index
    %3 = vector.load %arg3[%c0_3, %c0_4] : memref<16x2xf32, #tpu.memory_space<vmem>>, vector<16x1xf32>
    %c0_5 = arith.constant 0 : index
    %c1 = arith.constant 1 : index
    %4 = vector.load %arg3[%c0_5, %c1] : memref<16x2xf32, #tpu.memory_space<vmem>>, vector<16x1xf32>
    %cst_6 = arith.constant dense<0.000000e+00> : vector<16xf32>
    %5 = vector.multi_reduction <add>, %2, %cst_6 [1] : vector<16x128xf32> to vector<16xf32>
    %6 = vector.shape_cast %5 : vector<16xf32> to vector<16x1xf32>
    %cst_7 = arith.constant 1.280000e+02 : f32
    %7 = vector.broadcast %cst_7 : f32 to vector<16x1xf32>
    %8 = arith.divf %6, %7 : vector<16x1xf32>
    %9 = vector.broadcast %8 : vector<16x1xf32> to vector<16x128xf32>
    %10 = arith.subf %2, %9 : vector<16x128xf32>
    %11 = arith.mulf %10, %10 : vector<16x128xf32>
    %cst_8 = arith.constant dense<0.000000e+00> : vector<16xf32>
    %12 = vector.multi_reduction <add>, %11, %cst_8 [1] : vector<16x128xf32> to vector<16xf32>
    %13 = vector.shape_cast %12 : vector<16xf32> to vector<16x1xf32>
    %cst_9 = arith.constant 1.280000e+02 : f32
    %14 = vector.broadcast %cst_9 : f32 to vector<16x1xf32>
    %15 = arith.divf %13, %14 : vector<16x1xf32>
    %cst_10 = arith.constant 9.99999974E-6 : f32
    %16 = vector.broadcast %cst_10 : f32 to vector<16x1xf32>
    %17 = arith.addf %15, %16 : vector<16x1xf32>
    %18 = math.rsqrt %17 : vector<16x1xf32>
    %19 = arith.mulf %3, %18 : vector<16x1xf32>
    %20 = vector.broadcast %19 : vector<16x1xf32> to vector<16x128xf32>
    %21 = arith.mulf %10, %20 : vector<16x128xf32>
    %22 = vector.broadcast %4 : vector<16x1xf32> to vector<16x128xf32>
    %23 = arith.addf %21, %22 : vector<16x128xf32>
    %cst_11 = arith.constant 0.000000e+00 : f32
    %24 = vector.broadcast %cst_11 : f32 to vector<16x128xf32>
    %25 = arith.maximumf %23, %24 : vector<16x128xf32>
    %26 = arith.truncf %25 : vector<16x128xf32> to vector<16x128xbf16>
    %c0_12 = arith.constant 0 : index
    %c0_13 = arith.constant 0 : index
    %27 = vector.load %arg4[%c0_12, %c0_13] : memref<128x512xbf16, #tpu.memory_space<vmem>>, vector<128x512xbf16>
    %cst_14 = arith.constant dense<0.000000e+00> : vector<16x512xf32>
    %28 = tpu.matmul %26, %27, %cst_14 {dimension_numbers = #tpu.dot_dimension_numbers<[1], [0], [0], [1], [0, 0, 1, 1], [], []>} : vector<16x128xbf16>, vector<128x512xbf16>, vector<16x512xf32> -> vector<16x512xf32>
    %29 = arith.truncf %28 : vector<16x512xf32> to vector<16x512xbf16>
    %c0_15 = arith.constant 0 : index
    %c0_16 = arith.constant 0 : index
    %30 = vector.load %arg5[%c0_15, %c0_16] : memref<128x16xbf16, #tpu.memory_space<vmem>>, vector<128x16xbf16>
    %cst_17 = arith.constant 0.000000e+00 : f32
    %31 = vector.broadcast %cst_17 : f32 to vector<8x32xf32>
    %32 = vector.extract_strided_slice %30 {offsets = [0, 0], sizes = [8, 16], strides = [1, 1]} : vector<128x16xbf16> to vector<8x16xbf16>
    %33 = vector.extract_strided_slice %29 {offsets = [0, 0], sizes = [16, 32], strides = [1, 1]} : vector<16x512xbf16> to vector<16x32xbf16>
    %cst_18 = arith.constant dense<0.000000e+00> : vector<8x32xf32>
    %34 = tpu.matmul %32, %33, %cst_18 {dimension_numbers = #tpu.dot_dimension_numbers<[1], [0], [0], [1], [0, 0, 1, 1], [], []>} : vector<8x16xbf16>, vector<16x32xbf16>, vector<8x32xf32> -> vector<8x32xf32>
    %35 = arith.addf %31, %34 : vector<8x32xf32>
    %36 = vector.extract_strided_slice %30 {offsets = [8, 0], sizes = [8, 16], strides = [1, 1]} : vector<128x16xbf16> to vector<8x16xbf16>
    %37 = vector.extract_strided_slice %29 {offsets = [0, 32], sizes = [16, 32], strides = [1, 1]} : vector<16x512xbf16> to vector<16x32xbf16>
    %cst_19 = arith.constant dense<0.000000e+00> : vector<8x32xf32>
    %38 = tpu.matmul %36, %37, %cst_19 {dimension_numbers = #tpu.dot_dimension_numbers<[1], [0], [0], [1], [0, 0, 1, 1], [], []>} : vector<8x16xbf16>, vector<16x32xbf16>, vector<8x32xf32> -> vector<8x32xf32>
    %39 = arith.addf %35, %38 : vector<8x32xf32>
    %40 = vector.extract_strided_slice %30 {offsets = [16, 0], sizes = [8, 16], strides = [1, 1]} : vector<128x16xbf16> to vector<8x16xbf16>
    %41 = vector.extract_strided_slice %29 {offsets = [0, 64], sizes = [16, 32], strides = [1, 1]} : vector<16x512xbf16> to vector<16x32xbf16>
    %cst_20 = arith.constant dense<0.000000e+00> : vector<8x32xf32>
    %42 = tpu.matmul %40, %41, %cst_20 {dimension_numbers = #tpu.dot_dimension_numbers<[1], [0], [0], [1], [0, 0, 1, 1], [], []>} : vector<8x16xbf16>, vector<16x32xbf16>, vector<8x32xf32> -> vector<8x32xf32>
    %43 = arith.addf %39, %42 : vector<8x32xf32>
    %44 = vector.extract_strided_slice %30 {offsets = [24, 0], sizes = [8, 16], strides = [1, 1]} : vector<128x16xbf16> to vector<8x16xbf16>
    %45 = vector.extract_strided_slice %29 {offsets = [0, 96], sizes = [16, 32], strides = [1, 1]} : vector<16x512xbf16> to vector<16x32xbf16>
    %cst_21 = arith.constant dense<0.000000e+00> : vector<8x32xf32>
    %46 = tpu.matmul %44, %45, %cst_21 {dimension_numbers = #tpu.dot_dimension_numbers<[1], [0], [0], [1], [0, 0, 1, 1], [], []>} : vector<8x16xbf16>, vector<16x32xbf16>, vector<8x32xf32> -> vector<8x32xf32>
    %47 = arith.addf %43, %46 : vector<8x32xf32>
    %48 = vector.extract_strided_slice %30 {offsets = [32, 0], sizes = [8, 16], strides = [1, 1]} : vector<128x16xbf16> to vector<8x16xbf16>
    %49 = vector.extract_strided_slice %29 {offsets = [0, 128], sizes = [16, 32], strides = [1, 1]} : vector<16x512xbf16> to vector<16x32xbf16>
    %cst_22 = arith.constant dense<0.000000e+00> : vector<8x32xf32>
    %50 = tpu.matmul %48, %49, %cst_22 {dimension_numbers = #tpu.dot_dimension_numbers<[1], [0], [0], [1], [0, 0, 1, 1], [], []>} : vector<8x16xbf16>, vector<16x32xbf16>, vector<8x32xf32> -> vector<8x32xf32>
    %51 = arith.addf %47, %50 : vector<8x32xf32>
    %52 = vector.extract_strided_slice %30 {offsets = [40, 0], sizes = [8, 16], strides = [1, 1]} : vector<128x16xbf16> to vector<8x16xbf16>
    %53 = vector.extract_strided_slice %29 {offsets = [0, 160], sizes = [16, 32], strides = [1, 1]} : vector<16x512xbf16> to vector<16x32xbf16>
    %cst_23 = arith.constant dense<0.000000e+00> : vector<8x32xf32>
    %54 = tpu.matmul %52, %53, %cst_23 {dimension_numbers = #tpu.dot_dimension_numbers<[1], [0], [0], [1], [0, 0, 1, 1], [], []>} : vector<8x16xbf16>, vector<16x32xbf16>, vector<8x32xf32> -> vector<8x32xf32>
    %55 = arith.addf %51, %54 : vector<8x32xf32>
    %56 = vector.extract_strided_slice %30 {offsets = [48, 0], sizes = [8, 16], strides = [1, 1]} : vector<128x16xbf16> to vector<8x16xbf16>
    %57 = vector.extract_strided_slice %29 {offsets = [0, 192], sizes = [16, 32], strides = [1, 1]} : vector<16x512xbf16> to vector<16x32xbf16>
    %cst_24 = arith.constant dense<0.000000e+00> : vector<8x32xf32>
    %58 = tpu.matmul %56, %57, %cst_24 {dimension_numbers = #tpu.dot_dimension_numbers<[1], [0], [0], [1], [0, 0, 1, 1], [], []>} : vector<8x16xbf16>, vector<16x32xbf16>, vector<8x32xf32> -> vector<8x32xf32>
    %59 = arith.addf %55, %58 : vector<8x32xf32>
    %60 = vector.extract_strided_slice %30 {offsets = [56, 0], sizes = [8, 16], strides = [1, 1]} : vector<128x16xbf16> to vector<8x16xbf16>
    %61 = vector.extract_strided_slice %29 {offsets = [0, 224], sizes = [16, 32], strides = [1, 1]} : vector<16x512xbf16> to vector<16x32xbf16>
    %cst_25 = arith.constant dense<0.000000e+00> : vector<8x32xf32>
    %62 = tpu.matmul %60, %61, %cst_25 {dimension_numbers = #tpu.dot_dimension_numbers<[1], [0], [0], [1], [0, 0, 1, 1], [], []>} : vector<8x16xbf16>, vector<16x32xbf16>, vector<8x32xf32> -> vector<8x32xf32>
    %63 = arith.addf %59, %62 : vector<8x32xf32>
    %64 = vector.extract_strided_slice %30 {offsets = [64, 0], sizes = [8, 16], strides = [1, 1]} : vector<128x16xbf16> to vector<8x16xbf16>
    %65 = vector.extract_strided_slice %29 {offsets = [0, 256], sizes = [16, 32], strides = [1, 1]} : vector<16x512xbf16> to vector<16x32xbf16>
    %cst_26 = arith.constant dense<0.000000e+00> : vector<8x32xf32>
    %66 = tpu.matmul %64, %65, %cst_26 {dimension_numbers = #tpu.dot_dimension_numbers<[1], [0], [0], [1], [0, 0, 1, 1], [], []>} : vector<8x16xbf16>, vector<16x32xbf16>, vector<8x32xf32> -> vector<8x32xf32>
    %67 = arith.addf %63, %66 : vector<8x32xf32>
    %68 = vector.extract_strided_slice %30 {offsets = [72, 0], sizes = [8, 16], strides = [1, 1]} : vector<128x16xbf16> to vector<8x16xbf16>
    %69 = vector.extract_strided_slice %29 {offsets = [0, 288], sizes = [16, 32], strides = [1, 1]} : vector<16x512xbf16> to vector<16x32xbf16>
    %cst_27 = arith.constant dense<0.000000e+00> : vector<8x32xf32>
    %70 = tpu.matmul %68, %69, %cst_27 {dimension_numbers = #tpu.dot_dimension_numbers<[1], [0], [0], [1], [0, 0, 1, 1], [], []>} : vector<8x16xbf16>, vector<16x32xbf16>, vector<8x32xf32> -> vector<8x32xf32>
    %71 = arith.addf %67, %70 : vector<8x32xf32>
    %72 = vector.extract_strided_slice %30 {offsets = [80, 0], sizes = [8, 16], strides = [1, 1]} : vector<128x16xbf16> to vector<8x16xbf16>
    %73 = vector.extract_strided_slice %29 {offsets = [0, 320], sizes = [16, 32], strides = [1, 1]} : vector<16x512xbf16> to vector<16x32xbf16>
    %cst_28 = arith.constant dense<0.000000e+00> : vector<8x32xf32>
    %74 = tpu.matmul %72, %73, %cst_28 {dimension_numbers = #tpu.dot_dimension_numbers<[1], [0], [0], [1], [0, 0, 1, 1], [], []>} : vector<8x16xbf16>, vector<16x32xbf16>, vector<8x32xf32> -> vector<8x32xf32>
    %75 = arith.addf %71, %74 : vector<8x32xf32>
    %76 = vector.extract_strided_slice %30 {offsets = [88, 0], sizes = [8, 16], strides = [1, 1]} : vector<128x16xbf16> to vector<8x16xbf16>
    %77 = vector.extract_strided_slice %29 {offsets = [0, 352], sizes = [16, 32], strides = [1, 1]} : vector<16x512xbf16> to vector<16x32xbf16>
    %cst_29 = arith.constant dense<0.000000e+00> : vector<8x32xf32>
    %78 = tpu.matmul %76, %77, %cst_29 {dimension_numbers = #tpu.dot_dimension_numbers<[1], [0], [0], [1], [0, 0, 1, 1], [], []>} : vector<8x16xbf16>, vector<16x32xbf16>, vector<8x32xf32> -> vector<8x32xf32>
    %79 = arith.addf %75, %78 : vector<8x32xf32>
    %80 = vector.extract_strided_slice %30 {offsets = [96, 0], sizes = [8, 16], strides = [1, 1]} : vector<128x16xbf16> to vector<8x16xbf16>
    %81 = vector.extract_strided_slice %29 {offsets = [0, 384], sizes = [16, 32], strides = [1, 1]} : vector<16x512xbf16> to vector<16x32xbf16>
    %cst_30 = arith.constant dense<0.000000e+00> : vector<8x32xf32>
    %82 = tpu.matmul %80, %81, %cst_30 {dimension_numbers = #tpu.dot_dimension_numbers<[1], [0], [0], [1], [0, 0, 1, 1], [], []>} : vector<8x16xbf16>, vector<16x32xbf16>, vector<8x32xf32> -> vector<8x32xf32>
    %83 = arith.addf %79, %82 : vector<8x32xf32>
    %84 = vector.extract_strided_slice %30 {offsets = [104, 0], sizes = [8, 16], strides = [1, 1]} : vector<128x16xbf16> to vector<8x16xbf16>
    %85 = vector.extract_strided_slice %29 {offsets = [0, 416], sizes = [16, 32], strides = [1, 1]} : vector<16x512xbf16> to vector<16x32xbf16>
    %cst_31 = arith.constant dense<0.000000e+00> : vector<8x32xf32>
    %86 = tpu.matmul %84, %85, %cst_31 {dimension_numbers = #tpu.dot_dimension_numbers<[1], [0], [0], [1], [0, 0, 1, 1], [], []>} : vector<8x16xbf16>, vector<16x32xbf16>, vector<8x32xf32> -> vector<8x32xf32>
    %87 = arith.addf %83, %86 : vector<8x32xf32>
    %88 = vector.extract_strided_slice %30 {offsets = [112, 0], sizes = [8, 16], strides = [1, 1]} : vector<128x16xbf16> to vector<8x16xbf16>
    %89 = vector.extract_strided_slice %29 {offsets = [0, 448], sizes = [16, 32], strides = [1, 1]} : vector<16x512xbf16> to vector<16x32xbf16>
    %cst_32 = arith.constant dense<0.000000e+00> : vector<8x32xf32>
    %90 = tpu.matmul %88, %89, %cst_32 {dimension_numbers = #tpu.dot_dimension_numbers<[1], [0], [0], [1], [0, 0, 1, 1], [], []>} : vector<8x16xbf16>, vector<16x32xbf16>, vector<8x32xf32> -> vector<8x32xf32>
    %91 = arith.addf %87, %90 : vector<8x32xf32>
    %92 = vector.extract_strided_slice %30 {offsets = [120, 0], sizes = [8, 16], strides = [1, 1]} : vector<128x16xbf16> to vector<8x16xbf16>
    %93 = vector.extract_strided_slice %29 {offsets = [0, 480], sizes = [16, 32], strides = [1, 1]} : vector<16x512xbf16> to vector<16x32xbf16>
    %cst_33 = arith.constant dense<0.000000e+00> : vector<8x32xf32>
    %94 = tpu.matmul %92, %93, %cst_33 {dimension_numbers = #tpu.dot_dimension_numbers<[1], [0], [0], [1], [0, 0, 1, 1], [], []>} : vector<8x16xbf16>, vector<16x32xbf16>, vector<8x32xf32> -> vector<8x32xf32>
    %95 = arith.addf %91, %94 : vector<8x32xf32>
    %c0_34 = arith.constant 0 : index
    %c0_35 = arith.constant 0 : index
    %96 = vector.load %arg6[%c0_34, %c0_35] : memref<8x2xf32, #tpu.memory_space<vmem>>, vector<8x1xf32>
    %c0_36 = arith.constant 0 : index
    %c1_37 = arith.constant 1 : index
    %97 = vector.load %arg6[%c0_36, %c1_37] : memref<8x2xf32, #tpu.memory_space<vmem>>, vector<8x1xf32>
    %cst_38 = arith.constant dense<0.000000e+00> : vector<8xf32>
    %98 = vector.multi_reduction <add>, %95, %cst_38 [1] : vector<8x32xf32> to vector<8xf32>
    %99 = vector.shape_cast %98 : vector<8xf32> to vector<8x1xf32>
    %cst_39 = arith.constant 3.200000e+01 : f32
    %100 = vector.broadcast %cst_39 : f32 to vector<8x1xf32>
    %101 = arith.divf %99, %100 : vector<8x1xf32>
    %102 = vector.broadcast %101 : vector<8x1xf32> to vector<8x32xf32>
    %103 = arith.subf %95, %102 : vector<8x32xf32>
    %104 = arith.mulf %103, %103 : vector<8x32xf32>
    %cst_40 = arith.constant dense<0.000000e+00> : vector<8xf32>
    %105 = vector.multi_reduction <add>, %104, %cst_40 [1] : vector<8x32xf32> to vector<8xf32>
    %106 = vector.shape_cast %105 : vector<8xf32> to vector<8x1xf32>
    %cst_41 = arith.constant 3.200000e+01 : f32
    %107 = vector.broadcast %cst_41 : f32 to vector<8x1xf32>
    %108 = arith.divf %106, %107 : vector<8x1xf32>
    %cst_42 = arith.constant 9.99999974E-6 : f32
    %109 = vector.broadcast %cst_42 : f32 to vector<8x1xf32>
    %110 = arith.addf %108, %109 : vector<8x1xf32>
    %111 = math.rsqrt %110 : vector<8x1xf32>
    %112 = arith.mulf %96, %111 : vector<8x1xf32>
    %113 = vector.broadcast %112 : vector<8x1xf32> to vector<8x32xf32>
    %114 = arith.mulf %103, %113 : vector<8x32xf32>
    %115 = vector.broadcast %97 : vector<8x1xf32> to vector<8x32xf32>
    %116 = arith.addf %114, %115 : vector<8x32xf32>
    %cst_43 = arith.constant 0.000000e+00 : f32
    %117 = vector.broadcast %cst_43 : f32 to vector<8x32xf32>
    %118 = arith.maximumf %116, %117 : vector<8x32xf32>
    %119 = vector.extract_strided_slice %118 {offsets = [0, 0], sizes = [8, 16], strides = [1, 1]} : vector<8x32xf32> to vector<8x16xf32>
    %c0_44 = arith.constant 0 : index
    %c0_45 = arith.constant 0 : index
    %c0_46 = arith.constant 0 : index
    %120 = vector.load %arg7[%c0_44, %c0_45, %c0_46] : memref<2x8x16xf32, #tpu.memory_space<vmem>>, vector<1x8x16xf32>
    %121 = vector.shape_cast %120 : vector<1x8x16xf32> to vector<8x16xf32>
    %122 = vector.shape_cast %119 : vector<8x16xf32> to vector<1x8x16xf32>
    tpu.vector_store %arg7[%c0_44, %c0_45, %c0_46], %122 {strides = array<i32>} : memref<2x8x16xf32, #tpu.memory_space<vmem>>, vector<1x8x16xf32>,
    %123 = vector.extract_strided_slice %118 {offsets = [0, 16], sizes = [8, 16], strides = [1, 1]} : vector<8x32xf32> to vector<8x16xf32>
    %c1_47 = arith.constant 1 : index
    %c0_48 = arith.constant 0 : index
    %c0_49 = arith.constant 0 : index
    %124 = vector.load %arg7[%c1_47, %c0_48, %c0_49] : memref<2x8x16xf32, #tpu.memory_space<vmem>>, vector<1x8x16xf32>
    %125 = vector.shape_cast %124 : vector<1x8x16xf32> to vector<8x16xf32>
    %126 = vector.shape_cast %123 : vector<8x16xf32> to vector<1x8x16xf32>
    tpu.vector_store %arg7[%c1_47, %c0_48, %c0_49], %126 {strides = array<i32>} : memref<2x8x16xf32, #tpu.memory_space<vmem>>, vector<1x8x16xf32>,
    return
  }
  func.func @transform_0(%arg0: i32) -> (i32, i32) {
    %c0_i32 = arith.constant 0 : i32
    %c0_i32_0 = arith.constant 0 : i32
    %c0_i32_1 = arith.constant 0 : i32
    return %c0_i32, %c0_i32_0 : i32, i32
  }
  func.func @transform_1(%arg0: i32) -> (i32, i32) {
    %c0_i32 = arith.constant 0 : i32
    %c0_i32_0 = arith.constant 0 : i32
    %c0_i32_1 = arith.constant 0 : i32
    return %c0_i32, %c0_i32_0 : i32, i32
  }
  func.func @transform_2(%arg0: i32) -> (i32, i32) {
    %c0_i32 = arith.constant 0 : i32
    %c0_i32_0 = arith.constant 0 : i32
    %c0_i32_1 = arith.constant 0 : i32
    return %c0_i32, %c0_i32_0 : i32, i32
  }
  func.func @transform_3(%arg0: i32) -> (i32, i32) {
    %c0_i32 = arith.constant 0 : i32
    %c0_i32_0 = arith.constant 0 : i32
    %c0_i32_1 = arith.constant 0 : i32
    return %c0_i32, %c0_i32_0 : i32, i32
  }
  func.func @transform_4(%arg0: i32) -> (i32, i32) {
    %c0_i32 = arith.constant 0 : i32
    %c0_i32_0 = arith.constant 0 : i32
    %c0_i32_1 = arith.constant 0 : i32
    return %c0_i32, %c0_i32_0 : i32, i32
  }
  func.func @transform_5(%arg0: i32) -> (i32, i32) {
    %c0_i32 = arith.constant 0 : i32
    %c0_i32_0 = arith.constant 0 : i32
    %c0_i32_1 = arith.constant 0 : i32
    return %c0_i32, %c0_i32_0 : i32, i32
  }
  func.func @transform_6(%arg0: i32) -> (i32, i32, i32) {
    %c0_i32 = arith.constant 0 : i32
    %c0_i32_0 = arith.constant 0 : i32
    %c0_i32_1 = arith.constant 0 : i32
    %c0_i32_2 = arith.constant 0 : i32
    return %c0_i32, %c0_i32_0, %c0_i32_1 : i32, i32, i32
  }
}

</mosaic_0001>

<llo_original>
// kernel: encoder_forward.1
$region0: #{encoder_forward.1}
  #allocation0 [shape = 'u32[]', space=smem, size = 0x4, offset = 0x4, fixed_abs, tag = 'smem constant byte address 0x4 - core index']
  #allocation1 [shape = 'u32[144,128]{1,0:T(1,128)}', space=vmem, size = 0x12000, scoped, tag = 'internal scratch']
  %s0 = inlined_call_operand.vmem [shape: bf16[64,128], index: 0, kind: input, shape index: {}]
  %s1 = inlined_call_operand.vmem [shape: bf16[16,64], index: 1, kind: input, shape index: {}]
  %s2 = inlined_call_operand.vmem [shape: f32[16,2], index: 2, kind: input, shape index: {}]
  %s3 = inlined_call_operand.vmem [shape: bf16[128,512], index: 3, kind: input, shape index: {}]
  %s4 = inlined_call_operand.vmem [shape: bf16[128,16], index: 4, kind: input, shape index: {}]
  %s5 = inlined_call_operand.vmem [shape: f32[8,2], index: 5, kind: input, shape index: {}]
  %s6 = inlined_call_operand.vmem [shape: f32[2,8,16], index: 6, kind: output, shape index: {}]
  %s7 = sld [smem:[#allocation0]]
  $region34: #{encoder_forward.1} parent=0
    _
  %s9 = ssub.s32 1, %s7
  %s10 = scalar_select 0, %s9, %s7
  // Predicated region
  $region2: #{encoder_forward.1} parent=0 // pred_check
    _
  $region3: #{encoder_forward.1} parent=0 // pred_check_branch
    %12 = sbr.rel (0) target = $region5
  $region4: #{encoder_forward.1} parent=0 // pred_region
    _
  $region5: #{encoder_forward.1} parent=0 // pred_fallthru
    _
  // Predicated region
  $region6: #{encoder_forward.1} parent=0 // pred_check
    _
  $region7: #{encoder_forward.1} parent=0 // pred_check_branch
    %14 = sbr.rel (0) target = $region9
  $region8: #{encoder_forward.1} parent=0 // pred_region
    _
  $region9: #{encoder_forward.1} parent=0 // pred_fallthru
    _
  // Predicated region
  $region10: #{encoder_forward.1} parent=0 // pred_check
    _
  $region11: #{encoder_forward.1} parent=0 // pred_check_branch
    %16 = sbr.rel (0) target = $region13
  $region12: #{encoder_forward.1} parent=0 // pred_region
    _
  $region13: #{encoder_forward.1} parent=0 // pred_fallthru
    _
  // Predicated region
  $region14: #{encoder_forward.1} parent=0 // pred_check
    _
  $region15: #{encoder_forward.1} parent=0 // pred_check_branch
    %18 = sbr.rel (0) target = $region17
  $region16: #{encoder_forward.1} parent=0 // pred_region
    _
  $region17: #{encoder_forward.1} parent=0 // pred_fallthru
    _
  // Predicated region
  $region18: #{encoder_forward.1} parent=0 // pred_check
    _
  $region19: #{encoder_forward.1} parent=0 // pred_check_branch
    %20 = sbr.rel (0) target = $region21
  $region20: #{encoder_forward.1} parent=0 // pred_region
    _
  $region21: #{encoder_forward.1} parent=0 // pred_fallthru
    _
  // Predicated region
  $region22: #{encoder_forward.1} parent=0 // pred_check
    _
  $region23: #{encoder_forward.1} parent=0 // pred_check_branch
    %22 = sbr.rel (0) target = $region25
  $region24: #{encoder_forward.1} parent=0 // pred_region
    _
  $region25: #{encoder_forward.1} parent=0 // pred_fallthru
    _
  %v24 = vld [vmem:[%s1] sm:$0xf]
  %v25 = vld [vmem:[%s1 + $0x4] sm:$0xf]
  %v26 = vld [vmem:[%s0] sm:$0xf]
  %v27 = vld [vmem:[%s0 + $0x4] sm:$0xf]
  %v28 = vld [vmem:[%s0 + $0x8] sm:$0xf]
  %v29 = vld [vmem:[%s0 + $0xc] sm:$0xf]
  %v30 = vld [vmem:[%s0 + $0x10] sm:$0xf]
  %v31 = vld [vmem:[%s0 + $0x14] sm:$0xf]
  %v32 = vld [vmem:[%s0 + $0x18] sm:$0xf]
  %v33 = vld [vmem:[%s0 + $0x1c] sm:$0xf]
  %v36 = vunpack.c.l.b16 %v24
  %v37 = vunpack.c.l.b16 %v25
  %v38 = vpack.c.b16 %v37, %v36
  %v47 = vunpack.c.l.b16 %v26
  %v48 = vunpack.c.l.b16 %v27
  %v49 = vunpack.c.l.b16 %v28
  %v50 = vunpack.c.l.b16 %v29
  %v51 = vunpack.c.l.b16 %v30
  %v52 = vunpack.c.l.b16 %v31
  %v53 = vunpack.c.l.b16 %v32
  %v54 = vunpack.c.l.b16 %v33
  %v55 = vpack.c.b16 %v48, %v47
  %v56 = vpack.c.b16 %v50, %v49
  %v57 = vpack.c.b16 %v52, %v51
  %v58 = vpack.c.b16 %v54, %v53
  %vm63 = vcmask 523264
  %v65 = vsel %vm63, %v38, 0
  %67 = vmatprep.subr.bf16.mxu0 0
  %68 = vmatpush1.bf16.msra.mxu0 0
  %69 = vmatprep.subr.bf16.mxu0 0
  %70 = vmatpush1.bf16.msra.mxu0 0
  %71 = vmatprep.subr.bf16.mxu0 0
  %72 = vmatpush1.bf16.msra.mxu0 0
  %73 = vmatprep.subr.bf16.mxu0 0
  %74 = vmatpush1.bf16.msra.mxu0 0
  %75 = vmatprep.subr.bf16.mxu0 0
  %76 = vmatpush1.bf16.msra.mxu0 %v58
  %77 = vmatprep.subr.bf16.mxu0 0
  %78 = vmatpush1.bf16.msra.mxu0 %v57
  %79 = vmatprep.subr.bf16.mxu0 0
  %80 = vmatpush1.bf16.msra.mxu0 %v56
  %81 = vmatprep.subr.bf16.mxu0 0
  %82 = vmatpush1.bf16.msra.mxu0 %v55
  %83 = vmatprep.subr.bf16.mxu0 0
  %84 = vmatpush2.bf16.msra.mxu0 0
  %85 = vmatprep.subr.bf16.mxu0 0
  %86 = vmatpush2.bf16.msra.mxu0 0
  %87 = vmatprep.subr.bf16.mxu0 0
  %88 = vmatpush2.bf16.msra.mxu0 0
  %89 = vmatprep.subr.bf16.mxu0 0
  %90 = vmatpush2.bf16.msra.mxu0 0
  %91 = vmatprep.subr.bf16.mxu0 0
  %92 = vmatpush2.bf16.msra.mxu0 0
  %93 = vmatprep.subr.bf16.mxu0 0
  %94 = vmatpush2.bf16.msra.mxu0 0
  %95 = vmatprep.subr.bf16.mxu0 0
  %96 = vmatpush2.bf16.msra.mxu0 0
  %97 = vmatprep.subr.bf16.mxu0 0
  %98 = vmatpush2.bf16.msra.mxu0 0
  %99 = vmatprep.mubr.bf16.mxu0 0
  %100 = vmatmul.mubr.bf16.gmra.mxu0 %v65
  %v101 = vpop.f32.mrf.mxu0
  %v102 = vadd.f32 0.0, %v101
  %v103 = vpop.f32.mrf.mxu0
  %v104 = vpop.f32.mrf.mxu0
  %v105 = vadd.f32 0.0, %v104
  %v106 = vpop.f32.mrf.mxu0
  %107 = vdwg.mxu0
  %v108 = vld [vmem:[%s2] sm:$0xff]
  %v109 = vld [vmem:[%s2 + $0x8] sm:$0xff]
  %110 = vadd.xlane.f32.xlu0 %v102
  %v111 = vpop.xlane.xlu0 %110
  %112 = vadd.xlane.f32.xlu0 %v105
  %v113 = vpop.xlane.xlu0 %112
  %v114 = vrcp.pop 128.0
  %v115 = vmul.f32 %v111, %v114
  %v116 = vmul.f32 %v113, %v114
  %v117 = vsub.f32 %v102, %v115
  %v118 = vsub.f32 %v105, %v116
  %v119 = vmul.f32 %v117, %v117
  %v120 = vmul.f32 %v118, %v118
  %121 = vadd.xlane.f32.xlu0 %v119
  %v122 = vpop.xlane.xlu0 %121
  %123 = vadd.xlane.f32.xlu0 %v120
  %v124 = vpop.xlane.xlu0 %123
  %v125 = vmul.f32 %v122, %v114
  %v126 = vmul.f32 %v124, %v114
  %v127 = vadd.f32 %v125, 1e-05
  %v128 = vadd.f32 %v126, 1e-05
  %v129 = vrsqrt.pop %v127
  %v130 = vrsqrt.pop %v128
  %v131 = vmul.f32 %v108, %v129
  %v132 = vmul.f32 %v109, %v130
  %134 = vset.pattern.permute.xlu0 0
  %135 = vperm.xlu0 %134, %v131
  %v136 = vpop.permute.xlu0 %135
  %139 = vset.pattern.permute.xlu0 0
  %140 = vperm.xlu0 %139, %v132
  %v141 = vpop.permute.xlu0 %140
  %v143 = vmul.f32 %v117, %v136
  %v144 = vmul.f32 %v118, %v141
  %146 = vset.pattern.permute.xlu0 1
  %147 = vperm.xlu0 %146, %v108
  %v148 = vpop.permute.xlu0 %147
  %151 = vset.pattern.permute.xlu0 1
  %152 = vperm.xlu0 %151, %v109
  %v153 = vpop.permute.xlu0 %152
  %v155 = vadd.f32 %v143, %v148
  %v156 = vadd.f32 %v144, %v153
  %v157 = vmax.f32 %v155, 0.0
  %v158 = vmax.f32 %v156, 0.0
  %v159 = vpack.c.bf16 %v158, %v157
  %v160 = vld [vmem:[%s3] sm:$0xff]
  %v161 = vld [vmem:[%s3 + $0x8] sm:$0xff]
  %v162 = vld [vmem:[%s3 + $0x10] sm:$0xff]
  %v163 = vld [vmem:[%s3 + $0x18] sm:$0xff]
  %v164 = vld [vmem:[%s3 + $0x20] sm:$0xff]
  %v165 = vld [vmem:[%s3 + $0x28] sm:$0xff]
  %v166 = vld [vmem:[%s3 + $0x30] sm:$0xff]
  %v167 = vld [vmem:[%s3 + $0x38] sm:$0xff]
  %v168 = vld [vmem:[%s3 + $0x40] sm:$0xff]
  %v169 = vld [vmem:[%s3 + $0x48] sm:$0xff]
  %v170 = vld [vmem:[%s3 + $0x50] sm:$0xff]
  %v171 = vld [vmem:[%s3 + $0x58] sm:$0xff]
  %v172 = vld [vmem:[%s3 + $0x60] sm:$0xff]
  %v173 = vld [vmem:[%s3 + $0x68] sm:$0xff]
  %v174 = vld [vmem:[%s3 + $0x70] sm:$0xff]
  %v175 = vld [vmem:[%s3 + $0x78] sm:$0xff]
  %v176 = vld [vmem:[%s3 + $0x80] sm:$0xff]
  %v177 = vld [vmem:[%s3 + $0x88] sm:$0xff]
  %v178 = vld [vmem:[%s3 + $0x90] sm:$0xff]
  %v179 = vld [vmem:[%s3 + $0x98] sm:$0xff]
  %v180 = vld [vmem:[%s3 + $0xa0] sm:$0xff]
  %v181 = vld [vmem:[%s3 + $0xa8] sm:$0xff]
  %v182 = vld [vmem:[%s3 + $0xb0] sm:$0xff]
  %v183 = vld [vmem:[%s3 + $0xb8] sm:$0xff]
  %v184 = vld [vmem:[%s3 + $0xc0] sm:$0xff]
  %v185 = vld [vmem:[%s3 + $0xc8] sm:$0xff]
  %v186 = vld [vmem:[%s3 + $0xd0] sm:$0xff]
  %v187 = vld [vmem:[%s3 + $0xd8] sm:$0xff]
  %v188 = vld [vmem:[%s3 + $0xe0] sm:$0xff]
  %v189 = vld [vmem:[%s3 + $0xe8] sm:$0xff]
  %v190 = vld [vmem:[%s3 + $0xf0] sm:$0xff]
  %v191 = vld [vmem:[%s3 + $0xf8] sm:$0xff]
  %v224 = vunpack.c.l.b16 %v160
  %v225 = vunpack.c.h.b16 %v160
  %v226 = vunpack.c.l.b16 %v161
  %v227 = vunpack.c.h.b16 %v161
  %v228 = vunpack.c.l.b16 %v162
  %v229 = vunpack.c.h.b16 %v162
  %v230 = vunpack.c.l.b16 %v163
  %v231 = vunpack.c.h.b16 %v163
  %v232 = vunpack.c.l.b16 %v164
  %v233 = vunpack.c.h.b16 %v164
  %v234 = vunpack.c.l.b16 %v165
  %v235 = vunpack.c.h.b16 %v165
  %v236 = vunpack.c.l.b16 %v166
  %v237 = vunpack.c.h.b16 %v166
  %v238 = vunpack.c.l.b16 %v167
  %v239 = vunpack.c.h.b16 %v167
  %v240 = vunpack.c.l.b16 %v168
  %v241 = vunpack.c.h.b16 %v168
  %v242 = vunpack.c.l.b16 %v169
  %v243 = vunpack.c.h.b16 %v169
  %v244 = vunpack.c.l.b16 %v170
  %v245 = vunpack.c.h.b16 %v170
  %v246 = vunpack.c.l.b16 %v171
  %v247 = vunpack.c.h.b16 %v171
  %v248 = vunpack.c.l.b16 %v172
  %v249 = vunpack.c.h.b16 %v172
  %v250 = vunpack.c.l.b16 %v173
  %v251 = vunpack.c.h.b16 %v173
  %v252 = vunpack.c.l.b16 %v174
  %v253 = vunpack.c.h.b16 %v174
  %v254 = vunpack.c.l.b16 %v175
  %v255 = vunpack.c.h.b16 %v175
  %v256 = vunpack.c.l.b16 %v176
  %v257 = vunpack.c.h.b16 %v176
  %v258 = vunpack.c.l.b16 %v177
  %v259 = vunpack.c.h.b16 %v177
  %v260 = vunpack.c.l.b16 %v178
  %v261 = vunpack.c.h.b16 %v178
  %v262 = vunpack.c.l.b16 %v179
  %v263 = vunpack.c.h.b16 %v179
  %v264 = vunpack.c.l.b16 %v180
  %v265 = vunpack.c.h.b16 %v180
  %v266 = vunpack.c.l.b16 %v181
  %v267 = vunpack.c.h.b16 %v181
  %v268 = vunpack.c.l.b16 %v182
  %v269 = vunpack.c.h.b16 %v182
  %v270 = vunpack.c.l.b16 %v183
  %v271 = vunpack.c.h.b16 %v183
  %v272 = vunpack.c.l.b16 %v184
  %v273 = vunpack.c.h.b16 %v184
  %v274 = vunpack.c.l.b16 %v185
  %v275 = vunpack.c.h.b16 %v185
  %v276 = vunpack.c.l.b16 %v186
  %v277 = vunpack.c.h.b16 %v186
  %v278 = vunpack.c.l.b16 %v187
  %v279 = vunpack.c.h.b16 %v187
  %v280 = vunpack.c.l.b16 %v188
  %v281 = vunpack.c.h.b16 %v188
  %v282 = vunpack.c.l.b16 %v189
  %v283 = vunpack.c.h.b16 %v189
  %v284 = vunpack.c.l.b16 %v190
  %v285 = vunpack.c.h.b16 %v190
  %v286 = vunpack.c.l.b16 %v191
  %v287 = vunpack.c.h.b16 %v191
  %v288 = vpack.c.b16 %v228, %v224
  %v289 = vpack.c.b16 %v229, %v225
  %v290 = vpack.c.b16 %v230, %v226
  %v291 = vpack.c.b16 %v231, %v227
  %v292 = vpack.c.b16 %v236, %v232
  %v293 = vpack.c.b16 %v237, %v233
  %v294 = vpack.c.b16 %v238, %v234
  %v295 = vpack.c.b16 %v239, %v235
  %v296 = vpack.c.b16 %v244, %v240
  %v297 = vpack.c.b16 %v245, %v241
  %v298 = vpack.c.b16 %v246, %v242
  %v299 = vpack.c.b16 %v247, %v243
  %v300 = vpack.c.b16 %v252, %v248
  %v301 = vpack.c.b16 %v253, %v249
  %v302 = vpack.c.b16 %v254, %v250
  %v303 = vpack.c.b16 %v255, %v251
  %v304 = vpack.c.b16 %v260, %v256
  %v305 = vpack.c.b16 %v261, %v257
  %v306 = vpack.c.b16 %v262, %v258
  %v307 = vpack.c.b16 %v263, %v259
  %v308 = vpack.c.b16 %v268, %v264
  %v309 = vpack.c.b16 %v269, %v265
  %v310 = vpack.c.b16 %v270, %v266
  %v311 = vpack.c.b16 %v271, %v267
  %v312 = vpack.c.b16 %v276, %v272
  %v313 = vpack.c.b16 %v277, %v273
  %v314 = vpack.c.b16 %v278, %v274
  %v315 = vpack.c.b16 %v279, %v275
  %v316 = vpack.c.b16 %v284, %v280
  %v317 = vpack.c.b16 %v285, %v281
  %v318 = vpack.c.b16 %v286, %v282
  %v319 = vpack.c.b16 %v287, %v283
  %352 = vmatprep.subr.bf16.mxu0 %v317
  %353 = vmatpush1.bf16.msra.mxu0 %v316
  %354 = vmatprep.subr.bf16.mxu0 %v313
  %355 = vmatpush1.bf16.msra.mxu0 %v312
  %356 = vmatprep.subr.bf16.mxu0 %v309
  %357 = vmatpush1.bf16.msra.mxu0 %v308
  %358 = vmatprep.subr.bf16.mxu0 %v305
  %359 = vmatpush1.bf16.msra.mxu0 %v304
  %360 = vmatprep.subr.bf16.mxu0 %v301
  %361 = vmatpush1.bf16.msra.mxu0 %v300
  %362 = vmatprep.subr.bf16.mxu0 %v297
  %363 = vmatpush1.bf16.msra.mxu0 %v296
  %364 = vmatprep.subr.bf16.mxu0 %v293
  %365 = vmatpush1.bf16.msra.mxu0 %v292
  %366 = vmatprep.subr.bf16.mxu0 %v289
  %367 = vmatpush1.bf16.msra.mxu0 %v288
  %368 = vmatprep.subr.bf16.mxu0 0
  %369 = vmatpush2.bf16.msra.mxu0 0
  %370 = vmatprep.subr.bf16.mxu0 0
  %371 = vmatpush2.bf16.msra.mxu0 0
  %372 = vmatprep.subr.bf16.mxu0 0
  %373 = vmatpush2.bf16.msra.mxu0 0
  %374 = vmatprep.subr.bf16.mxu0 0
  %375 = vmatpush2.bf16.msra.mxu0 0
  %376 = vmatprep.subr.bf16.mxu0 0
  %377 = vmatpush2.bf16.msra.mxu0 0
  %378 = vmatprep.subr.bf16.mxu0 0
  %379 = vmatpush2.bf16.msra.mxu0 0
  %380 = vmatprep.subr.bf16.mxu0 0
  %381 = vmatpush2.bf16.msra.mxu0 0
  %382 = vmatprep.subr.bf16.mxu0 0
  %383 = vmatpush2.bf16.msra.mxu0 0
  %384 = vmatprep.mubr.bf16.mxu0 0
  %385 = vmatmul.mubr.bf16.gmra.mxu0 %v159
  %v386 = vpop.f32.mrf.mxu0
  %v387 = vadd.f32 0.0, %v386
  %v388 = vpop.f32.mrf.mxu0
  %v389 = vadd.f32 0.0, %v388
  %v390 = vpop.f32.mrf.mxu0
  %v391 = vadd.f32 0.0, %v390
  %v392 = vpop.f32.mrf.mxu0
  %v393 = vadd.f32 0.0, %v392
  %394 = vdwg.mxu0
  %395 = vmatprep.subr.bf16.mxu0 %v319
  %396 = vmatpush1.bf16.msra.mxu0 %v318
  %397 = vmatprep.subr.bf16.mxu0 %v315
  %398 = vmatpush1.bf16.msra.mxu0 %v314
  %399 = vmatprep.subr.bf16.mxu0 %v311
  %400 = vmatpush1.bf16.msra.mxu0 %v310
  %401 = vmatprep.subr.bf16.mxu0 %v307
  %402 = vmatpush1.bf16.msra.mxu0 %v306
  %403 = vmatprep.subr.bf16.mxu0 %v303
  %404 = vmatpush1.bf16.msra.mxu0 %v302
  %405 = vmatprep.subr.bf16.mxu0 %v299
  %406 = vmatpush1.bf16.msra.mxu0 %v298
  %407 = vmatprep.subr.bf16.mxu0 %v295
  %408 = vmatpush1.bf16.msra.mxu0 %v294
  %409 = vmatprep.subr.bf16.mxu0 %v291
  %410 = vmatpush1.bf16.msra.mxu0 %v290
  %411 = vmatprep.subr.bf16.mxu0 0
  %412 = vmatpush2.bf16.msra.mxu0 0
  %413 = vmatprep.subr.bf16.mxu0 0
  %414 = vmatpush2.bf16.msra.mxu0 0
  %415 = vmatprep.subr.bf16.mxu0 0
  %416 = vmatpush2.bf16.msra.mxu0 0
  %417 = vmatprep.subr.bf16.mxu0 0
  %418 = vmatpush2.bf16.msra.mxu0 0
  %419 = vmatprep.subr.bf16.mxu0 0
  %420 = vmatpush2.bf16.msra.mxu0 0
  %421 = vmatprep.subr.bf16.mxu0 0
  %422 = vmatpush2.bf16.msra.mxu0 0
  %423 = vmatprep.subr.bf16.mxu0 0
  %424 = vmatpush2.bf16.msra.mxu0 0
  %425 = vmatprep.subr.bf16.mxu0 0
  %426 = vmatpush2.bf16.msra.mxu0 0
  %427 = vmatprep.mubr.bf16.mxu0 0
  %428 = vmatmul.mubr.bf16.gmra.mxu0 %v159
  %v429 = vpop.f32.mrf.mxu0
  %v430 = vadd.f32 0.0, %v429
  %v431 = vpop.f32.mrf.mxu0
  %v432 = vadd.f32 0.0, %v431
  %v433 = vpop.f32.mrf.mxu0
  %v434 = vadd.f32 0.0, %v433
  %v435 = vpop.f32.mrf.mxu0
  %v436 = vadd.f32 0.0, %v435
  %437 = vdwg.mxu0
  %v438 = vpack.c.bf16 %v391, %v387
  %v439 = vpack.c.bf16 %v393, %v389
  %v440 = vpack.c.bf16 %v434, %v430
  %v441 = vpack.c.bf16 %v436, %v432
  %v442 = vld [vmem:[%s4] sm:$0xf]
  %v443 = vld [vmem:[%s4 + $0x4] sm:$0xf]
  %v444 = vld [vmem:[%s4 + $0x8] sm:$0xf]
  %v445 = vld [vmem:[%s4 + $0xc] sm:$0xf]
  %v446 = vld [vmem:[%s4 + $0x10] sm:$0xf]
  %v447 = vld [vmem:[%s4 + $0x14] sm:$0xf]
  %v448 = vld [vmem:[%s4 + $0x18] sm:$0xf]
  %v449 = vld [vmem:[%s4 + $0x1c] sm:$0xf]
  %v450 = vld [vmem:[%s4 + $0x20] sm:$0xf]
  %v451 = vld [vmem:[%s4 + $0x24] sm:$0xf]
  %v452 = vld [vmem:[%s4 + $0x28] sm:$0xf]
  %v453 = vld [vmem:[%s4 + $0x2c] sm:$0xf]
  %v454 = vld [vmem:[%s4 + $0x30] sm:$0xf]
  %v455 = vld [vmem:[%s4 + $0x34] sm:$0xf]
  %v456 = vld [vmem:[%s4 + $0x38] sm:$0xf]
  %v457 = vld [vmem:[%s4 + $0x3c] sm:$0xf]
  %459 = vrot.lane.b32.xlu0 %v438, 96
  %v460 = vpop.permute.xlu0 %459
  %vm462 = vcmask 130048
  %v464 = vsel %vm462, %v443, 0
  %466 = vmatprep.subr.bf16.mxu0 0
  %467 = vmatpush1.bf16.msra.mxu0 0
  %468 = vmatprep.subr.bf16.mxu0 0
  %469 = vmatpush1.bf16.msra.mxu0 0
  %470 = vmatprep.subr.bf16.mxu0 0
  %471 = vmatpush1.bf16.msra.mxu0 0
  %472 = vmatprep.subr.bf16.mxu0 0
  %473 = vmatpush1.bf16.msra.mxu0 0
  %474 = vmatprep.subr.bf16.mxu0 0
  %475 = vmatpush1.bf16.msra.mxu0 0
  %476 = vmatprep.subr.bf16.mxu0 0
  %477 = vmatpush1.bf16.msra.mxu0 0
  %478 = vmatprep.subr.bf16.mxu0 0
  %479 = vmatpush1.bf16.msra.mxu0 0
  %480 = vmatprep.subr.bf16.mxu0 0
  %481 = vmatpush1.bf16.msra.mxu0 %v460
  %482 = vmatprep.subr.bf16.mxu0 0
  %483 = vmatpush2.bf16.msra.mxu0 0
  %484 = vmatprep.subr.bf16.mxu0 0
  %485 = vmatpush2.bf16.msra.mxu0 0
  %486 = vmatprep.subr.bf16.mxu0 0
  %487 = vmatpush2.bf16.msra.mxu0 0
  %488 = vmatprep.subr.bf16.mxu0 0
  %489 = vmatpush2.bf16.msra.mxu0 0
  %490 = vmatprep.subr.bf16.mxu0 0
  %491 = vmatpush2.bf16.msra.mxu0 0
  %492 = vmatprep.subr.bf16.mxu0 0
  %493 = vmatpush2.bf16.msra.mxu0 0
  %494 = vmatprep.subr.bf16.mxu0 0
  %495 = vmatpush2.bf16.msra.mxu0 0
  %496 = vmatprep.subr.bf16.mxu0 0
  %497 = vmatpush2.bf16.msra.mxu0 0
  %498 = vmatprep.mubr.bf16.mxu0 0
  %499 = vmatmul.mubr.bf16.gmra.mxu0 %v464
  %v500 = vpop.f32.mrf.mxu0
  %v501 = vadd.f32 0.0, %v500
  %v502 = vpop.f32.mrf.mxu0
  %v503 = vpop.f32.mrf.mxu0
  %v504 = vpop.f32.mrf.mxu0
  %505 = vdwg.mxu0
  %v507 = vsel %vm462, %v442, 0
  %509 = vmatprep.subr.bf16.mxu0 0
  %510 = vmatpush1.bf16.msra.mxu0 0
  %511 = vmatprep.subr.bf16.mxu0 0
  %512 = vmatpush1.bf16.msra.mxu0 0
  %513 = vmatprep.subr.bf16.mxu0 0
  %514 = vmatpush1.bf16.msra.mxu0 0
  %515 = vmatprep.subr.bf16.mxu0 0
  %516 = vmatpush1.bf16.msra.mxu0 0
  %517 = vmatprep.subr.bf16.mxu0 0
  %518 = vmatpush1.bf16.msra.mxu0 0
  %519 = vmatprep.subr.bf16.mxu0 0
  %520 = vmatpush1.bf16.msra.mxu0 0
  %521 = vmatprep.subr.bf16.mxu0 0
  %522 = vmatpush1.bf16.msra.mxu0 0
  %523 = vmatprep.subr.bf16.mxu0 0
  %524 = vmatpush1.bf16.msra.mxu0 %v438
  %525 = vmatprep.subr.bf16.mxu0 0
  %526 = vmatpush2.bf16.msra.mxu0 0
  %527 = vmatprep.subr.bf16.mxu0 0
  %528 = vmatpush2.bf16.msra.mxu0 0
  %529 = vmatprep.subr.bf16.mxu0 0
  %530 = vmatpush2.bf16.msra.mxu0 0
  %531 = vmatprep.subr.bf16.mxu0 0
  %532 = vmatpush2.bf16.msra.mxu0 0
  %533 = vmatprep.subr.bf16.mxu0 0
  %534 = vmatpush2.bf16.msra.mxu0 0
  %535 = vmatprep.subr.bf16.mxu0 0
  %536 = vmatpush2.bf16.msra.mxu0 0
  %537 = vmatprep.subr.bf16.mxu0 0
  %538 = vmatpush2.bf16.msra.mxu0 0
  %539 = vmatprep.subr.bf16.mxu0 0
  %540 = vmatpush2.bf16.msra.mxu0 0
  %541 = vmatprep.mubr.bf16.mxu0 0
  %542 = vmatmul.mubr.bf16.gmra.mxu0 %v507
  %v543 = vpop.f32.mrf.mxu0
  %v544 = vadd.f32 %v501, %v543
  %v545 = vpop.f32.mrf.mxu0
  %v546 = vpop.f32.mrf.mxu0
  %v547 = vpop.f32.mrf.mxu0
  %548 = vdwg.mxu0
  %549 = vrot.lane.b32.xlu0 %v438, 64
  %v550 = vpop.permute.xlu0 %549
  %v553 = vsel %vm462, %v444, 0
  %555 = vmatprep.subr.bf16.mxu0 0
  %556 = vmatpush1.bf16.msra.mxu0 0
  %557 = vmatprep.subr.bf16.mxu0 0
  %558 = vmatpush1.bf16.msra.mxu0 0
  %559 = vmatprep.subr.bf16.mxu0 0
  %560 = vmatpush1.bf16.msra.mxu0 0
  %561 = vmatprep.subr.bf16.mxu0 0
  %562 = vmatpush1.bf16.msra.mxu0 0
  %563 = vmatprep.subr.bf16.mxu0 0
  %564 = vmatpush1.bf16.msra.mxu0 0
  %565 = vmatprep.subr.bf16.mxu0 0
  %566 = vmatpush1.bf16.msra.mxu0 0
  %567 = vmatprep.subr.bf16.mxu0 0
  %568 = vmatpush1.bf16.msra.mxu0 0
  %569 = vmatprep.subr.bf16.mxu0 0
  %570 = vmatpush1.bf16.msra.mxu0 %v550
  %571 = vmatprep.subr.bf16.mxu0 0
  %572 = vmatpush2.bf16.msra.mxu0 0
  %573 = vmatprep.subr.bf16.mxu0 0
  %574 = vmatpush2.bf16.msra.mxu0 0
  %575 = vmatprep.subr.bf16.mxu0 0
  %576 = vmatpush2.bf16.msra.mxu0 0
  %577 = vmatprep.subr.bf16.mxu0 0
  %578 = vmatpush2.bf16.msra.mxu0 0
  %579 = vmatprep.subr.bf16.mxu0 0
  %580 = vmatpush2.bf16.msra.mxu0 0
  %581 = vmatprep.subr.bf16.mxu0 0
  %582 = vmatpush2.bf16.msra.mxu0 0
  %583 = vmatprep.subr.bf16.mxu0 0
  %584 = vmatpush2.bf16.msra.mxu0 0
  %585 = vmatprep.subr.bf16.mxu0 0
  %586 = vmatpush2.bf16.msra.mxu0 0
  %587 = vmatprep.mubr.bf16.mxu0 0
  %588 = vmatmul.mubr.bf16.gmra.mxu0 %v553
  %v589 = vpop.f32.mrf.mxu0
  %v590 = vadd.f32 0.0, %v589
  %v591 = vpop.f32.mrf.mxu0
  %v592 = vpop.f32.mrf.mxu0
  %v593 = vpop.f32.mrf.mxu0
  %594 = vdwg.mxu0
  %v595 = vadd.f32 %v544, %v590
  %596 = vrot.lane.b32.xlu0 %v438, 32
  %v597 = vpop.permute.xlu0 %596
  %v600 = vsel %vm462, %v445, 0
  %602 = vmatprep.subr.bf16.mxu0 0
  %603 = vmatpush1.bf16.msra.mxu0 0
  %604 = vmatprep.subr.bf16.mxu0 0
  %605 = vmatpush1.bf16.msra.mxu0 0
  %606 = vmatprep.subr.bf16.mxu0 0
  %607 = vmatpush1.bf16.msra.mxu0 0
  %608 = vmatprep.subr.bf16.mxu0 0
  %609 = vmatpush1.bf16.msra.mxu0 0
  %610 = vmatprep.subr.bf16.mxu0 0
  %611 = vmatpush1.bf16.msra.mxu0 0
  %612 = vmatprep.subr.bf16.mxu0 0
  %613 = vmatpush1.bf16.msra.mxu0 0
  %614 = vmatprep.subr.bf16.mxu0 0
  %615 = vmatpush1.bf16.msra.mxu0 0
  %616 = vmatprep.subr.bf16.mxu0 0
  %617 = vmatpush1.bf16.msra.mxu0 %v597
  %618 = vmatprep.subr.bf16.mxu0 0
  %619 = vmatpush2.bf16.msra.mxu0 0
  %620 = vmatprep.subr.bf16.mxu0 0
  %621 = vmatpush2.bf16.msra.mxu0 0
  %622 = vmatprep.subr.bf16.mxu0 0
  %623 = vmatpush2.bf16.msra.mxu0 0
  %624 = vmatprep.subr.bf16.mxu0 0
  %625 = vmatpush2.bf16.msra.mxu0 0
  %626 = vmatprep.subr.bf16.mxu0 0
  %627 = vmatpush2.bf16.msra.mxu0 0
  %628 = vmatprep.subr.bf16.mxu0 0
  %629 = vmatpush2.bf16.msra.mxu0 0
  %630 = vmatprep.subr.bf16.mxu0 0
  %631 = vmatpush2.bf16.msra.mxu0 0
  %632 = vmatprep.subr.bf16.mxu0 0
  %633 = vmatpush2.bf16.msra.mxu0 0
  %634 = vmatprep.mubr.bf16.mxu0 0
  %635 = vmatmul.mubr.bf16.gmra.mxu0 %v600
  %v636 = vpop.f32.mrf.mxu0
  %v637 = vadd.f32 0.0, %v636
  %v638 = vpop.f32.mrf.mxu0
  %v639 = vpop.f32.mrf.mxu0
  %v640 = vpop.f32.mrf.mxu0
  %641 = vdwg.mxu0
  %v642 = vadd.f32 %v595, %v637
  %v644 = vsel %vm462, %v446, 0
  %646 = vmatprep.subr.bf16.mxu0 0
  %647 = vmatpush1.bf16.msra.mxu0 0
  %648 = vmatprep.subr.bf16.mxu0 0
  %649 = vmatpush1.bf16.msra.mxu0 0
  %650 = vmatprep.subr.bf16.mxu0 0
  %651 = vmatpush1.bf16.msra.mxu0 0
  %652 = vmatprep.subr.bf16.mxu0 0
  %653 = vmatpush1.bf16.msra.mxu0 0
  %654 = vmatprep.subr.bf16.mxu0 0
  %655 = vmatpush1.bf16.msra.mxu0 0
  %656 = vmatprep.subr.bf16.mxu0 0
  %657 = vmatpush1.bf16.msra.mxu0 0
  %658 = vmatprep.subr.bf16.mxu0 0
  %659 = vmatpush1.bf16.msra.mxu0 0
  %660 = vmatprep.subr.bf16.mxu0 0
  %661 = vmatpush1.bf16.msra.mxu0 %v439
  %662 = vmatprep.subr.bf16.mxu0 0
  %663 = vmatpush2.bf16.msra.mxu0 0
  %664 = vmatprep.subr.bf16.mxu0 0
  %665 = vmatpush2.bf16.msra.mxu0 0
  %666 = vmatprep.subr.bf16.mxu0 0
  %667 = vmatpush2.bf16.msra.mxu0 0
  %668 = vmatprep.subr.bf16.mxu0 0
  %669 = vmatpush2.bf16.msra.mxu0 0
  %670 = vmatprep.subr.bf16.mxu0 0
  %671 = vmatpush2.bf16.msra.mxu0 0
  %672 = vmatprep.subr.bf16.mxu0 0
  %673 = vmatpush2.bf16.msra.mxu0 0
  %674 = vmatprep.subr.bf16.mxu0 0
  %675 = vmatpush2.bf16.msra.mxu0 0
  %676 = vmatprep.subr.bf16.mxu0 0
  %677 = vmatpush2.bf16.msra.mxu0 0
  %678 = vmatprep.mubr.bf16.mxu0 0
  %679 = vmatmul.mubr.bf16.gmra.mxu0 %v644
  %v680 = vpop.f32.mrf.mxu0
  %v681 = vadd.f32 0.0, %v680
  %v682 = vpop.f32.mrf.mxu0
  %v683 = vpop.f32.mrf.mxu0
  %v684 = vpop.f32.mrf.mxu0
  %685 = vdwg.mxu0
  %v686 = vadd.f32 %v642, %v681
  %688 = vrot.lane.b32.xlu0 %v439, 96
  %v689 = vpop.permute.xlu0 %688
  %v692 = vsel %vm462, %v447, 0
  %694 = vmatprep.subr.bf16.mxu0 0
  %695 = vmatpush1.bf16.msra.mxu0 0
  %696 = vmatprep.subr.bf16.mxu0 0
  %697 = vmatpush1.bf16.msra.mxu0 0
  %698 = vmatprep.subr.bf16.mxu0 0
  %699 = vmatpush1.bf16.msra.mxu0 0
  %700 = vmatprep.subr.bf16.mxu0 0
  %701 = vmatpush1.bf16.msra.mxu0 0
  %702 = vmatprep.subr.bf16.mxu0 0
  %703 = vmatpush1.bf16.msra.mxu0 0
  %704 = vmatprep.subr.bf16.mxu0 0
  %705 = vmatpush1.bf16.msra.mxu0 0
  %706 = vmatprep.subr.bf16.mxu0 0
  %707 = vmatpush1.bf16.msra.mxu0 0
  %708 = vmatprep.subr.bf16.mxu0 0
  %709 = vmatpush1.bf16.msra.mxu0 %v689
  %710 = vmatprep.subr.bf16.mxu0 0
  %711 = vmatpush2.bf16.msra.mxu0 0
  %712 = vmatprep.subr.bf16.mxu0 0
  %713 = vmatpush2.bf16.msra.mxu0 0
  %714 = vmatprep.subr.bf16.mxu0 0
  %715 = vmatpush2.bf16.msra.mxu0 0
  %716 = vmatprep.subr.bf16.mxu0 0
  %717 = vmatpush2.bf16.msra.mxu0 0
  %718 = vmatprep.subr.bf16.mxu0 0
  %719 = vmatpush2.bf16.msra.mxu0 0
  %720 = vmatprep.subr.bf16.mxu0 0
  %721 = vmatpush2.bf16.msra.mxu0 0
  %722 = vmatprep.subr.bf16.mxu0 0
  %723 = vmatpush2.bf16.msra.mxu0 0
  %724 = vmatprep.subr.bf16.mxu0 0
  %725 = vmatpush2.bf16.msra.mxu0 0
  %726 = vmatprep.mubr.bf16.mxu0 0
  %727 = vmatmul.mubr.bf16.gmra.mxu0 %v692
  %v728 = vpop.f32.mrf.mxu0
  %v729 = vadd.f32 0.0, %v728
  %v730 = vpop.f32.mrf.mxu0
  %v731 = vpop.f32.mrf.mxu0
  %v732 = vpop.f32.mrf.mxu0
  %733 = vdwg.mxu0
  %v734 = vadd.f32 %v686, %v729
  %735 = vrot.lane.b32.xlu0 %v439, 64
  %v736 = vpop.permute.xlu0 %735
  %v739 = vsel %vm462, %v448, 0
  %741 = vmatprep.subr.bf16.mxu0 0
  %742 = vmatpush1.bf16.msra.mxu0 0
  %743 = vmatprep.subr.bf16.mxu0 0
  %744 = vmatpush1.bf16.msra.mxu0 0
  %745 = vmatprep.subr.bf16.mxu0 0
  %746 = vmatpush1.bf16.msra.mxu0 0
  %747 = vmatprep.subr.bf16.mxu0 0
  %748 = vmatpush1.bf16.msra.mxu0 0
  %749 = vmatprep.subr.bf16.mxu0 0
  %750 = vmatpush1.bf16.msra.mxu0 0
  %751 = vmatprep.subr.bf16.mxu0 0
  %752 = vmatpush1.bf16.msra.mxu0 0
  %753 = vmatprep.subr.bf16.mxu0 0
  %754 = vmatpush1.bf16.msra.mxu0 0
  %755 = vmatprep.subr.bf16.mxu0 0
  %756 = vmatpush1.bf16.msra.mxu0 %v736
  %757 = vmatprep.subr.bf16.mxu0 0
  %758 = vmatpush2.bf16.msra.mxu0 0
  %759 = vmatprep.subr.bf16.mxu0 0
  %760 = vmatpush2.bf16.msra.mxu0 0
  %761 = vmatprep.subr.bf16.mxu0 0
  %762 = vmatpush2.bf16.msra.mxu0 0
  %763 = vmatprep.subr.bf16.mxu0 0
  %764 = vmatpush2.bf16.msra.mxu0 0
  %765 = vmatprep.subr.bf16.mxu0 0
  %766 = vmatpush2.bf16.msra.mxu0 0
  %767 = vmatprep.subr.bf16.mxu0 0
  %768 = vmatpush2.bf16.msra.mxu0 0
  %769 = vmatprep.subr.bf16.mxu0 0
  %770 = vmatpush2.bf16.msra.mxu0 0
  %771 = vmatprep.subr.bf16.mxu0 0
  %772 = vmatpush2.bf16.msra.mxu0 0
  %773 = vmatprep.mubr.bf16.mxu0 0
  %774 = vmatmul.mubr.bf16.gmra.mxu0 %v739
  %v775 = vpop.f32.mrf.mxu0
  %v776 = vadd.f32 0.0, %v775
  %v777 = vpop.f32.mrf.mxu0
  %v778 = vpop.f32.mrf.mxu0
  %v779 = vpop.f32.mrf.mxu0
  %780 = vdwg.mxu0
  %v781 = vadd.f32 %v734, %v776
  %782 = vrot.lane.b32.xlu0 %v439, 32
  %v783 = vpop.permute.xlu0 %782
  %v786 = vsel %vm462, %v449, 0
  %788 = vmatprep.subr.bf16.mxu0 0
  %789 = vmatpush1.bf16.msra.mxu0 0
  %790 = vmatprep.subr.bf16.mxu0 0
  %791 = vmatpush1.bf16.msra.mxu0 0
  %792 = vmatprep.subr.bf16.mxu0 0
  %793 = vmatpush1.bf16.msra.mxu0 0
  %794 = vmatprep.subr.bf16.mxu0 0
  %795 = vmatpush1.bf16.msra.mxu0 0
  %796 = vmatprep.subr.bf16.mxu0 0
  %797 = vmatpush1.bf16.msra.mxu0 0
  %798 = vmatprep.subr.bf16.mxu0 0
  %799 = vmatpush1.bf16.msra.mxu0 0
  %800 = vmatprep.subr.bf16.mxu0 0
  %801 = vmatpush1.bf16.msra.mxu0 0
  %802 = vmatprep.subr.bf16.mxu0 0
  %803 = vmatpush1.bf16.msra.mxu0 %v783
  %804 = vmatprep.subr.bf16.mxu0 0
  %805 = vmatpush2.bf16.msra.mxu0 0
  %806 = vmatprep.subr.bf16.mxu0 0
  %807 = vmatpush2.bf16.msra.mxu0 0
  %808 = vmatprep.subr.bf16.mxu0 0
  %809 = vmatpush2.bf16.msra.mxu0 0
  %810 = vmatprep.subr.bf16.mxu0 0
  %811 = vmatpush2.bf16.msra.mxu0 0
  %812 = vmatprep.subr.bf16.mxu0 0
  %813 = vmatpush2.bf16.msra.mxu0 0
  %814 = vmatprep.subr.bf16.mxu0 0
  %815 = vmatpush2.bf16.msra.mxu0 0
  %816 = vmatprep.subr.bf16.mxu0 0
  %817 = vmatpush2.bf16.msra.mxu0 0
  %818 = vmatprep.subr.bf16.mxu0 0
  %819 = vmatpush2.bf16.msra.mxu0 0
  %820 = vmatprep.mubr.bf16.mxu0 0
  %821 = vmatmul.mubr.bf16.gmra.mxu0 %v786
  %v822 = vpop.f32.mrf.mxu0
  %v823 = vadd.f32 0.0, %v822
  %v824 = vpop.f32.mrf.mxu0
  %v825 = vpop.f32.mrf.mxu0
  %v826 = vpop.f32.mrf.mxu0
  %827 = vdwg.mxu0
  %v828 = vadd.f32 %v781, %v823
  %v830 = vsel %vm462, %v450, 0
  %832 = vmatprep.subr.bf16.mxu0 0
  %833 = vmatpush1.bf16.msra.mxu0 0
  %834 = vmatprep.subr.bf16.mxu0 0
  %835 = vmatpush1.bf16.msra.mxu0 0
  %836 = vmatprep.subr.bf16.mxu0 0
  %837 = vmatpush1.bf16.msra.mxu0 0
  %838 = vmatprep.subr.bf16.mxu0 0
  %839 = vmatpush1.bf16.msra.mxu0 0
  %840 = vmatprep.subr.bf16.mxu0 0
  %841 = vmatpush1.bf16.msra.mxu0 0
  %842 = vmatprep.subr.bf16.mxu0 0
  %843 = vmatpush1.bf16.msra.mxu0 0
  %844 = vmatprep.subr.bf16.mxu0 0
  %845 = vmatpush1.bf16.msra.mxu0 0
  %846 = vmatprep.subr.bf16.mxu0 0
  %847 = vmatpush1.bf16.msra.mxu0 %v440
  %848 = vmatprep.subr.bf16.mxu0 0
  %849 = vmatpush2.bf16.msra.mxu0 0
  %850 = vmatprep.subr.bf16.mxu0 0
  %851 = vmatpush2.bf16.msra.mxu0 0
  %852 = vmatprep.subr.bf16.mxu0 0
  %853 = vmatpush2.bf16.msra.mxu0 0
  %854 = vmatprep.subr.bf16.mxu0 0
  %855 = vmatpush2.bf16.msra.mxu0 0
  %856 = vmatprep.subr.bf16.mxu0 0
  %857 = vmatpush2.bf16.msra.mxu0 0
  %858 = vmatprep.subr.bf16.mxu0 0
  %859 = vmatpush2.bf16.msra.mxu0 0
  %860 = vmatprep.subr.bf16.mxu0 0
  %861 = vmatpush2.bf16.msra.mxu0 0
  %862 = vmatprep.subr.bf16.mxu0 0
  %863 = vmatpush2.bf16.msra.mxu0 0
  %864 = vmatprep.mubr.bf16.mxu0 0
  %865 = vmatmul.mubr.bf16.gmra.mxu0 %v830
  %v866 = vpop.f32.mrf.mxu0
  %v867 = vadd.f32 0.0, %v866
  %v868 = vpop.f32.mrf.mxu0
  %v869 = vpop.f32.mrf.mxu0
  %v870 = vpop.f32.mrf.mxu0
  %871 = vdwg.mxu0
  %v872 = vadd.f32 %v828, %v867
  %874 = vrot.lane.b32.xlu0 %v440, 96
  %v875 = vpop.permute.xlu0 %874
  %v878 = vsel %vm462, %v451, 0
  %880 = vmatprep.subr.bf16.mxu0 0
  %881 = vmatpush1.bf16.msra.mxu0 0
  %882 = vmatprep.subr.bf16.mxu0 0
  %883 = vmatpush1.bf16.msra.mxu0 0
  %884 = vmatprep.subr.bf16.mxu0 0
  %885 = vmatpush1.bf16.msra.mxu0 0
  %886 = vmatprep.subr.bf16.mxu0 0
  %887 = vmatpush1.bf16.msra.mxu0 0
  %888 = vmatprep.subr.bf16.mxu0 0
  %889 = vmatpush1.bf16.msra.mxu0 0
  %890 = vmatprep.subr.bf16.mxu0 0
  %891 = vmatpush1.bf16.msra.mxu0 0
  %892 = vmatprep.subr.bf16.mxu0 0
  %893 = vmatpush1.bf16.msra.mxu0 0
  %894 = vmatprep.subr.bf16.mxu0 0
  %895 = vmatpush1.bf16.msra.mxu0 %v875
  %896 = vmatprep.subr.bf16.mxu0 0
  %897 = vmatpush2.bf16.msra.mxu0 0
  %898 = vmatprep.subr.bf16.mxu0 0
  %899 = vmatpush2.bf16.msra.mxu0 0
  %900 = vmatprep.subr.bf16.mxu0 0
  %901 = vmatpush2.bf16.msra.mxu0 0
  %902 = vmatprep.subr.bf16.mxu0 0
  %903 = vmatpush2.bf16.msra.mxu0 0
  %904 = vmatprep.subr.bf16.mxu0 0
  %905 = vmatpush2.bf16.msra.mxu0 0
  %906 = vmatprep.subr.bf16.mxu0 0
  %907 = vmatpush2.bf16.msra.mxu0 0
  %908 = vmatprep.subr.bf16.mxu0 0
  %909 = vmatpush2.bf16.msra.mxu0 0
  %910 = vmatprep.subr.bf16.mxu0 0
  %911 = vmatpush2.bf16.msra.mxu0 0
  %912 = vmatprep.mubr.bf16.mxu0 0
  %913 = vmatmul.mubr.bf16.gmra.mxu0 %v878
  %v914 = vpop.f32.mrf.mxu0
  %v915 = vadd.f32 0.0, %v914
  %v916 = vpop.f32.mrf.mxu0
  %v917 = vpop.f32.mrf.mxu0
  %v918 = vpop.f32.mrf.mxu0
  %919 = vdwg.mxu0
  %v920 = vadd.f32 %v872, %v915
  %921 = vrot.lane.b32.xlu0 %v440, 64
  %v922 = vpop.permute.xlu0 %921
  %v925 = vsel %vm462, %v452, 0
  %927 = vmatprep.subr.bf16.mxu0 0
  %928 = vmatpush1.bf16.msra.mxu0 0
  %929 = vmatprep.subr.bf16.mxu0 0
  %930 = vmatpush1.bf16.msra.mxu0 0
  %931 = vmatprep.subr.bf16.mxu0 0
  %932 = vmatpush1.bf16.msra.mxu0 0
  %933 = vmatprep.subr.bf16.mxu0 0
  %934 = vmatpush1.bf16.msra.mxu0 0
  %935 = vmatprep.subr.bf16.mxu0 0
  %936 = vmatpush1.bf16.msra.mxu0 0
  %937 = vmatprep.subr.bf16.mxu0 0
  %938 = vmatpush1.bf16.msra.mxu0 0
  %939 = vmatprep.subr.bf16.mxu0 0
  %940 = vmatpush1.bf16.msra.mxu0 0
  %941 = vmatprep.subr.bf16.mxu0 0
  %942 = vmatpush1.bf16.msra.mxu0 %v922
  %943 = vmatprep.subr.bf16.mxu0 0
  %944 = vmatpush2.bf16.msra.mxu0 0
  %945 = vmatprep.subr.bf16.mxu0 0
  %946 = vmatpush2.bf16.msra.mxu0 0
  %947 = vmatprep.subr.bf16.mxu0 0
  %948 = vmatpush2.bf16.msra.mxu0 0
  %949 = vmatprep.subr.bf16.mxu0 0
  %950 = vmatpush2.bf16.msra.mxu0 0
  %951 = vmatprep.subr.bf16.mxu0 0
  %952 = vmatpush2.bf16.msra.mxu0 0
  %953 = vmatprep.subr.bf16.mxu0 0
  %954 = vmatpush2.bf16.msra.mxu0 0
  %955 = vmatprep.subr.bf16.mxu0 0
  %956 = vmatpush2.bf16.msra.mxu0 0
  %957 = vmatprep.subr.bf16.mxu0 0
  %958 = vmatpush2.bf16.msra.mxu0 0
  %959 = vmatprep.mubr.bf16.mxu0 0
  %960 = vmatmul.mubr.bf16.gmra.mxu0 %v925
  %v961 = vpop.f32.mrf.mxu0
  %v962 = vadd.f32 0.0, %v961
  %v963 = vpop.f32.mrf.mxu0
  %v964 = vpop.f32.mrf.mxu0
  %v965 = vpop.f32.mrf.mxu0
  %966 = vdwg.mxu0
  %v967 = vadd.f32 %v920, %v962
  %968 = vrot.lane.b32.xlu0 %v440, 32
  %v969 = vpop.permute.xlu0 %968
  %v972 = vsel %vm462, %v453, 0
  %974 = vmatprep.subr.bf16.mxu0 0
  %975 = vmatpush1.bf16.msra.mxu0 0
  %976 = vmatprep.subr.bf16.mxu0 0
  %977 = vmatpush1.bf16.msra.mxu0 0
  %978 = vmatprep.subr.bf16.mxu0 0
  %979 = vmatpush1.bf16.msra.mxu0 0
  %980 = vmatprep.subr.bf16.mxu0 0
  %981 = vmatpush1.bf16.msra.mxu0 0
  %982 = vmatprep.subr.bf16.mxu0 0
  %983 = vmatpush1.bf16.msra.mxu0 0
  %984 = vmatprep.subr.bf16.mxu0 0
  %985 = vmatpush1.bf16.msra.mxu0 0
  %986 = vmatprep.subr.bf16.mxu0 0
  %987 = vmatpush1.bf16.msra.mxu0 0
  %988 = vmatprep.subr.bf16.mxu0 0
  %989 = vmatpush1.bf16.msra.mxu0 %v969
  %990 = vmatprep.subr.bf16.mxu0 0
  %991 = vmatpush2.bf16.msra.mxu0 0
  %992 = vmatprep.subr.bf16.mxu0 0
  %993 = vmatpush2.bf16.msra.mxu0 0
  %994 = vmatprep.subr.bf16.mxu0 0
  %995 = vmatpush2.bf16.msra.mxu0 0
  %996 = vmatprep.subr.bf16.mxu0 0
  %997 = vmatpush2.bf16.msra.mxu0 0
  %998 = vmatprep.subr.bf16.mxu0 0
  %999 = vmatpush2.bf16.msra.mxu0 0
  %1000 = vmatprep.subr.bf16.mxu0 0
  %1001 = vmatpush2.bf16.msra.mxu0 0
  %1002 = vmatprep.subr.bf16.mxu0 0
  %1003 = vmatpush2.bf16.msra.mxu0 0
  %1004 = vmatprep.subr.bf16.mxu0 0
  %1005 = vmatpush2.bf16.msra.mxu0 0
  %1006 = vmatprep.mubr.bf16.mxu0 0
  %1007 = vmatmul.mubr.bf16.gmra.mxu0 %v972
  %v1008 = vpop.f32.mrf.mxu0
  %v1009 = vadd.f32 0.0, %v1008
  %v1010 = vpop.f32.mrf.mxu0
  %v1011 = vpop.f32.mrf.mxu0
  %v1012 = vpop.f32.mrf.mxu0
  %1013 = vdwg.mxu0
  %v1014 = vadd.f32 %v967, %v1009
  %v1016 = vsel %vm462, %v454, 0
  %1018 = vmatprep.subr.bf16.mxu0 0
  %1019 = vmatpush1.bf16.msra.mxu0 0
  %1020 = vmatprep.subr.bf16.mxu0 0
  %1021 = vmatpush1.bf16.msra.mxu0 0
  %1022 = vmatprep.subr.bf16.mxu0 0
  %1023 = vmatpush1.bf16.msra.mxu0 0
  %1024 = vmatprep.subr.bf16.mxu0 0
  %1025 = vmatpush1.bf16.msra.mxu0 0
  %1026 = vmatprep.subr.bf16.mxu0 0
  %1027 = vmatpush1.bf16.msra.mxu0 0
  %1028 = vmatprep.subr.bf16.mxu0 0
  %1029 = vmatpush1.bf16.msra.mxu0 0
  %1030 = vmatprep.subr.bf16.mxu0 0
  %1031 = vmatpush1.bf16.msra.mxu0 0
  %1032 = vmatprep.subr.bf16.mxu0 0
  %1033 = vmatpush1.bf16.msra.mxu0 %v441
  %1034 = vmatprep.subr.bf16.mxu0 0
  %1035 = vmatpush2.bf16.msra.mxu0 0
  %1036 = vmatprep.subr.bf16.mxu0 0
  %1037 = vmatpush2.bf16.msra.mxu0 0
  %1038 = vmatprep.subr.bf16.mxu0 0
  %1039 = vmatpush2.bf16.msra.mxu0 0
  %1040 = vmatprep.subr.bf16.mxu0 0
  %1041 = vmatpush2.bf16.msra.mxu0 0
  %1042 = vmatprep.subr.bf16.mxu0 0
  %1043 = vmatpush2.bf16.msra.mxu0 0
  %1044 = vmatprep.subr.bf16.mxu0 0
  %1045 = vmatpush2.bf16.msra.mxu0 0
  %1046 = vmatprep.subr.bf16.mxu0 0
  %1047 = vmatpush2.bf16.msra.mxu0 0
  %1048 = vmatprep.subr.bf16.mxu0 0
  %1049 = vmatpush2.bf16.msra.mxu0 0
  %1050 = vmatprep.mubr.bf16.mxu0 0
  %1051 = vmatmul.mubr.bf16.gmra.mxu0 %v1016
  %v1052 = vpop.f32.mrf.mxu0
  %v1053 = vadd.f32 0.0, %v1052
  %v1054 = vpop.f32.mrf.mxu0
  %v1055 = vpop.f32.mrf.mxu0
  %v1056 = vpop.f32.mrf.mxu0
  %1057 = vdwg.mxu0
  %v1058 = vadd.f32 %v1014, %v1053
  %1060 = vrot.lane.b32.xlu0 %v441, 96
  %v1061 = vpop.permute.xlu0 %1060
  %v1064 = vsel %vm462, %v455, 0
  %1066 = vmatprep.subr.bf16.mxu0 0
  %1067 = vmatpush1.bf16.msra.mxu0 0
  %1068 = vmatprep.subr.bf16.mxu0 0
  %1069 = vmatpush1.bf16.msra.mxu0 0
  %1070 = vmatprep.subr.bf16.mxu0 0
  %1071 = vmatpush1.bf16.msra.mxu0 0
  %1072 = vmatprep.subr.bf16.mxu0 0
  %1073 = vmatpush1.bf16.msra.mxu0 0
  %1074 = vmatprep.subr.bf16.mxu0 0
  %1075 = vmatpush1.bf16.msra.mxu0 0
  %1076 = vmatprep.subr.bf16.mxu0 0
  %1077 = vmatpush1.bf16.msra.mxu0 0
  %1078 = vmatprep.subr.bf16.mxu0 0
  %1079 = vmatpush1.bf16.msra.mxu0 0
  %1080 = vmatprep.subr.bf16.mxu0 0
  %1081 = vmatpush1.bf16.msra.mxu0 %v1061
  %1082 = vmatprep.subr.bf16.mxu0 0
  %1083 = vmatpush2.bf16.msra.mxu0 0
  %1084 = vmatprep.subr.bf16.mxu0 0
  %1085 = vmatpush2.bf16.msra.mxu0 0
  %1086 = vmatprep.subr.bf16.mxu0 0
  %1087 = vmatpush2.bf16.msra.mxu0 0
  %1088 = vmatprep.subr.bf16.mxu0 0
  %1089 = vmatpush2.bf16.msra.mxu0 0
  %1090 = vmatprep.subr.bf16.mxu0 0
  %1091 = vmatpush2.bf16.msra.mxu0 0
  %1092 = vmatprep.subr.bf16.mxu0 0
  %1093 = vmatpush2.bf16.msra.mxu0 0
  %1094 = vmatprep.subr.bf16.mxu0 0
  %1095 = vmatpush2.bf16.msra.mxu0 0
  %1096 = vmatprep.subr.bf16.mxu0 0
  %1097 = vmatpush2.bf16.msra.mxu0 0
  %1098 = vmatprep.mubr.bf16.mxu0 0
  %1099 = vmatmul.mubr.bf16.gmra.mxu0 %v1064
  %v1100 = vpop.f32.mrf.mxu0
  %v1101 = vadd.f32 0.0, %v1100
  %v1102 = vpop.f32.mrf.mxu0
  %v1103 = vpop.f32.mrf.mxu0
  %v1104 = vpop.f32.mrf.mxu0
  %1105 = vdwg.mxu0
  %v1106 = vadd.f32 %v1058, %v1101
  %1107 = vrot.lane.b32.xlu0 %v441, 64
  %v1108 = vpop.permute.xlu0 %1107
  %v1111 = vsel %vm462, %v456, 0
  %1113 = vmatprep.subr.bf16.mxu0 0
  %1114 = vmatpush1.bf16.msra.mxu0 0
  %1115 = vmatprep.subr.bf16.mxu0 0
  %1116 = vmatpush1.bf16.msra.mxu0 0
  %1117 = vmatprep.subr.bf16.mxu0 0
  %1118 = vmatpush1.bf16.msra.mxu0 0
  %1119 = vmatprep.subr.bf16.mxu0 0
  %1120 = vmatpush1.bf16.msra.mxu0 0
  %1121 = vmatprep.subr.bf16.mxu0 0
  %1122 = vmatpush1.bf16.msra.mxu0 0
  %1123 = vmatprep.subr.bf16.mxu0 0
  %1124 = vmatpush1.bf16.msra.mxu0 0
  %1125 = vmatprep.subr.bf16.mxu0 0
  %1126 = vmatpush1.bf16.msra.mxu0 0
  %1127 = vmatprep.subr.bf16.mxu0 0
  %1128 = vmatpush1.bf16.msra.mxu0 %v1108
  %1129 = vmatprep.subr.bf16.mxu0 0
  %1130 = vmatpush2.bf16.msra.mxu0 0
  %1131 = vmatprep.subr.bf16.mxu0 0
  %1132 = vmatpush2.bf16.msra.mxu0 0
  %1133 = vmatprep.subr.bf16.mxu0 0
  %1134 = vmatpush2.bf16.msra.mxu0 0
  %1135 = vmatprep.subr.bf16.mxu0 0
  %1136 = vmatpush2.bf16.msra.mxu0 0
  %1137 = vmatprep.subr.bf16.mxu0 0
  %1138 = vmatpush2.bf16.msra.mxu0 0
  %1139 = vmatprep.subr.bf16.mxu0 0
  %1140 = vmatpush2.bf16.msra.mxu0 0
  %1141 = vmatprep.subr.bf16.mxu0 0
  %1142 = vmatpush2.bf16.msra.mxu0 0
  %1143 = vmatprep.subr.bf16.mxu0 0
  %1144 = vmatpush2.bf16.msra.mxu0 0
  %1145 = vmatprep.mubr.bf16.mxu0 0
  %1146 = vmatmul.mubr.bf16.gmra.mxu0 %v1111
  %v1147 = vpop.f32.mrf.mxu0
  %v1148 = vadd.f32 0.0, %v1147
  %v1149 = vpop.f32.mrf.mxu0
  %v1150 = vpop.f32.mrf.mxu0
  %v1151 = vpop.f32.mrf.mxu0
  %1152 = vdwg.mxu0
  %v1153 = vadd.f32 %v1106, %v1148
  %1154 = vrot.lane.b32.xlu0 %v441, 32
  %v1155 = vpop.permute.xlu0 %1154
  %v1158 = vsel %vm462, %v457, 0
  %1160 = vmatprep.subr.bf16.mxu0 0
  %1161 = vmatpush1.bf16.msra.mxu0 0
  %1162 = vmatprep.subr.bf16.mxu0 0
  %1163 = vmatpush1.bf16.msra.mxu0 0
  %1164 = vmatprep.subr.bf16.mxu0 0
  %1165 = vmatpush1.bf16.msra.mxu0 0
  %1166 = vmatprep.subr.bf16.mxu0 0
  %1167 = vmatpush1.bf16.msra.mxu0 0
  %1168 = vmatprep.subr.bf16.mxu0 0
  %1169 = vmatpush1.bf16.msra.mxu0 0
  %1170 = vmatprep.subr.bf16.mxu0 0
  %1171 = vmatpush1.bf16.msra.mxu0 0
  %1172 = vmatprep.subr.bf16.mxu0 0
  %1173 = vmatpush1.bf16.msra.mxu0 0
  %1174 = vmatprep.subr.bf16.mxu0 0
  %1175 = vmatpush1.bf16.msra.mxu0 %v1155
  %1176 = vmatprep.subr.bf16.mxu0 0
  %1177 = vmatpush2.bf16.msra.mxu0 0
  %1178 = vmatprep.subr.bf16.mxu0 0
  %1179 = vmatpush2.bf16.msra.mxu0 0
  %1180 = vmatprep.subr.bf16.mxu0 0
  %1181 = vmatpush2.bf16.msra.mxu0 0
  %1182 = vmatprep.subr.bf16.mxu0 0
  %1183 = vmatpush2.bf16.msra.mxu0 0
  %1184 = vmatprep.subr.bf16.mxu0 0
  %1185 = vmatpush2.bf16.msra.mxu0 0
  %1186 = vmatprep.subr.bf16.mxu0 0
  %1187 = vmatpush2.bf16.msra.mxu0 0
  %1188 = vmatprep.subr.bf16.mxu0 0
  %1189 = vmatpush2.bf16.msra.mxu0 0
  %1190 = vmatprep.subr.bf16.mxu0 0
  %1191 = vmatpush2.bf16.msra.mxu0 0
  %1192 = vmatprep.mubr.bf16.mxu0 0
  %1193 = vmatmul.mubr.bf16.gmra.mxu0 %v1158
  %v1194 = vpop.f32.mrf.mxu0
  %v1195 = vadd.f32 0.0, %v1194
  %v1196 = vpop.f32.mrf.mxu0
  %v1197 = vpop.f32.mrf.mxu0
  %v1198 = vpop.f32.mrf.mxu0
  %1199 = vdwg.mxu0
  %v1200 = vadd.f32 %v1153, %v1195
  %v1201 = vld [vmem:[%s5] sm:$0xff]
  %vm1202 = vcmask 261120
  %v1203 = vsel %vm1202, %v1200, 0.0
  %1204 = vadd.xlane.f32.xlu0 %v1203
  %v1205 = vpop.xlane.xlu0 %1204
  %v1206 = vrcp.pop 32.0
  %v1207 = vmul.f32 %v1205, %v1206
  %v1208 = vsub.f32 %v1200, %v1207
  %v1209 = vmul.f32 %v1208, %v1208
  %v1210 = vsel %vm1202, %v1209, 0.0
  %1211 = vadd.xlane.f32.xlu0 %v1210
  %v1212 = vpop.xlane.xlu0 %1211
  %v1213 = vmul.f32 %v1212, %v1206
  %v1214 = vadd.f32 %v1213, 1e-05
  %v1215 = vrsqrt.pop %v1214
  %v1216 = vmul.f32 %v1201, %v1215
  %1218 = vset.pattern.permute.xlu0 0
  %1219 = vperm.xlu0 %1218, %v1216
  %v1220 = vpop.permute.xlu0 %1219
  %v1222 = vmul.f32 %v1208, %v1220
  %1224 = vset.pattern.permute.xlu0 1
  %1225 = vperm.xlu0 %1224, %v1201
  %v1226 = vpop.permute.xlu0 %1225
  %v1228 = vadd.f32 %v1222, %v1226
  %v1229 = vmax.f32 %v1228, 0.0
  %1230 = vst.msk [vmem:[%s6] sm:$0xff] %vm462, %v1229
  %1232 = vrot.lane.b32.xlu0 %v1229, 112
  %v1233 = vpop.permute.xlu0 %1232
  %s1235 = scalar_lea.vmem %s6, 8
  %1236 = vst.msk [vmem:[%s1235] sm:$0xff] %vm462, %v1233
  // Predicated region
  $region26: #{encoder_forward.1} parent=0 // pred_check
    _
  $region27: #{encoder_forward.1} parent=0 // pred_check_branch
    %1238 = sbr.rel (0) target = $region29
  $region28: #{encoder_forward.1} parent=0 // pred_region
    _
  $region29: #{encoder_forward.1} parent=0 // pred_fallthru
    _
  // Predicated region
  $region30: #{encoder_forward.1} parent=0 // pred_check
    _
  $region31: #{encoder_forward.1} parent=0 // pred_check_branch
    %1240 = sbr.rel (0) target = $region33
  $region32: #{encoder_forward.1} parent=0 // pred_region
    _
  $region33: #{encoder_forward.1} parent=0 // pred_fallthru
    _

</llo_original>
